<compile_context>
chip_gen: v7x
topology: tpu7x:2x2x1
jax: 0.10.0
libtpu: 0.0.40
codegen_flags: <defaults>
</compile_context>

<pallas_src>
import functools
import math

import jax
import jax.numpy as jnp
from jax.experimental import pallas as pl
from jax.experimental.pallas import tpu as pltpu


N_PAD = 128  # lane-dense padded width for the classifier output

CFG = dict(vocab_size=64, d_model=32, num_heads=4, d_kv=8, d_ff=64,
           num_layers=2, rel_buckets=32, rel_max_distance=128, num_labels=3)


# ----------------------------------------------------------------------------
# Fused Pallas kernel: entire T5 encoder + classifier head, VMEM resident
# ----------------------------------------------------------------------------

def _make_fused_kernel(B, S, D, H, dk, F, L, inner):
    """Builds a kernel closure with all shapes static."""
    BS = B * S

    def kernel(x_ref, bias_ref, ln0_ref, wq_ref, wk_ref, wv_ref, wo_ref,
               ln1_ref, wi_ref, woff_ref, lnf_ref, clsw_ref, clsb_ref,
               out_ref):

        def rms(x, g):
            # T5LayerNorm: no mean subtraction, no bias, eps=1e-6 (f32 math)
            var = jnp.mean(x * x, axis=-1, keepdims=True)
            return x * jax.lax.rsqrt(var + 1e-6) * g

        def mxu(a, w_bf16):
            # bf16 MXU inputs, f32 accumulation
            return jnp.dot(a.astype(jnp.bfloat16), w_bf16,
                           preferred_element_type=jnp.float32)

        h = x_ref[...]                                 # (B*S, D) f32
        bias = bias_ref[...]                           # (H*B*S, H*B*S) f32

        for l in range(L):                             # 2 layers, unrolled
            # ---- self-attention block (pre-RMSNorm, residual; eval => no dropout)
            xn = rms(h, ln0_ref[l])
            q = mxu(xn, wq_ref[l])                     # (BS, inner) f32
            k = mxu(xn, wk_ref[l])
            v = mxu(xn, wv_ref[l])

            # restack head-major: (H*B*S, dk).  Row index = hh*BS + b*S + s,
            # matching the precomputed block-diagonal bias layout.
            q_st = jnp.concatenate(
                [q[:, hh * dk:(hh + 1) * dk] for hh in range(H)], axis=0)
            k_st = jnp.concatenate(
                [k[:, hh * dk:(hh + 1) * dk] for hh in range(H)], axis=0)
            v_st = jnp.concatenate(
                [v[:, hh * dk:(hh + 1) * dk] for hh in range(H)],
                axis=0).astype(jnp.bfloat16)

            # single block-diagonal attention: cross-(head,batch) blocks carry
            # a -1e9 bias so their softmax weights vanish.
            # NOTE: T5 does NOT scale queries by 1/sqrt(d_k).
            s = jax.lax.dot_general(                   # q_st @ k_st^T
                q_st.astype(jnp.bfloat16), k_st.astype(jnp.bfloat16),
                (((1,), (1,)), ((), ())),
                preferred_element_type=jnp.float32)    # (HBS, HBS)
            s = s + bias
            m = jnp.max(s, axis=-1, keepdims=True)
            p = jnp.exp(s - m)
            p = p * pl.reciprocal(
                jnp.sum(p, axis=-1, keepdims=True), approx=True)
            ctx_st = jnp.dot(p.astype(jnp.bfloat16), v_st,
                             preferred_element_type=jnp.float32)  # (HBS, dk)

            # unstack back to (BS, inner), entirely in vregs
            ctx = jnp.concatenate(
                [ctx_st[hh * BS:(hh + 1) * BS, :] for hh in range(H)], axis=-1)

            h = h + mxu(ctx, wo_ref[l])

            # ---- feed-forward block (DenseReluDense, no biases)
            xn = rms(h, ln1_ref[l])
            ff = jnp.maximum(mxu(xn, wi_ref[l]), 0.0)
            h = h + mxu(ff, woff_ref[l])

        # ---- final layernorm + classifier, token-0 rows only (lane-dense store)
        h0 = jnp.concatenate([h[b * S:b * S + 1, :] for b in range(B)], axis=0)
        hn = rms(h0, lnf_ref[...])                     # (B, D)
        out_ref[...] = mxu(hn, clsw_ref[...]) + clsb_ref[...]   # (B, 128)

    return kernel


# ----------------------------------------------------------------------------
# Glue: T5 relative position bias (index math only)
# ----------------------------------------------------------------------------

def relative_position_bucket(relative_position, num_buckets=32, max_distance=128):
    # Bidirectional (encoder) bucketing, matches HF T5Attention._relative_position_bucket
    num_buckets //= 2
    relative_buckets = (relative_position > 0).astype(jnp.int32) * num_buckets
    rp = jnp.abs(relative_position)
    max_exact = num_buckets // 2
    is_small = rp < max_exact
    rp_safe = jnp.maximum(rp, 1).astype(jnp.float32)
    rp_if_large = max_exact + (
        jnp.log(rp_safe / max_exact) / math.log(max_distance / max_exact)
        * (num_buckets - max_exact)
    ).astype(jnp.int32)
    rp_if_large = jnp.minimum(rp_if_large, num_buckets - 1)
    relative_buckets += jnp.where(is_small, rp, rp_if_large)
    return relative_buckets


# ----------------------------------------------------------------------------
# Params: synthetic tiny T5 encoder + classifier head (deterministic weights)
# ----------------------------------------------------------------------------

def build_params(key, cfg):
    D, H, dk, F = cfg['d_model'], cfg['num_heads'], cfg['d_kv'], cfg['d_ff']
    inner = H * dk
    i = [0]

    def nrm(shape, scale=0.05):
        i[0] += 1
        return scale * jax.random.normal(jax.random.fold_in(key, i[0]), shape,
                                         dtype=jnp.float32)

    layers = []
    for _ in range(cfg['num_layers']):
        layers.append(dict(
            ln0=jnp.ones((1, D), jnp.float32),        # T5 init: layernorm weight = 1
            wq=nrm((D, inner)), wk=nrm((D, inner)),
            wv=nrm((D, inner)), wo=nrm((inner, D)),
            ln1=jnp.ones((1, D), jnp.float32),
            wi=nrm((D, F)), wo_ff=nrm((F, D)),
        ))
    return dict(
        embedding=nrm((cfg['vocab_size'], D), scale=1.0),
        rel_attn_bias=nrm((cfg['rel_buckets'], H)),   # shared (layer-0-owned) bias
        layers=layers,
        ln_final=jnp.ones((1, D), jnp.float32),
        cls_w=nrm((D, cfg['num_labels'])),            # pre-transposed (in, out)
        cls_b=nrm((1, cfg['num_labels'])),
    )


def prepare_params(params, cfg):
    """One-time packing for the fused kernel: stack layers, cast matmul
    weights to bf16, lane-pad the classifier to 128 columns."""
    D = cfg['d_model']
    n = cfg['num_labels']
    layers = params['layers']

    def stack(name, bf16=False):
        s = jnp.stack([lyr[name] for lyr in layers], axis=0)
        return s.astype(jnp.bfloat16) if bf16 else s

    cls_w_pad = jnp.zeros((D, N_PAD), jnp.float32)
    cls_w_pad = cls_w_pad.at[:, :n].set(params['cls_w']).astype(jnp.bfloat16)
    cls_b_pad = jnp.zeros((1, N_PAD), jnp.float32).at[:, :n].set(params['cls_b'])

    return dict(
        embedding=params['embedding'],
        rel_attn_bias=params['rel_attn_bias'],
        ln0=stack('ln0'),                              # (L, 1, D) f32
        wq=stack('wq', True),                          # (L, D, I) bf16
        wk=stack('wk', True),
        wv=stack('wv', True),
        wo=stack('wo', True),                          # (L, I, D) bf16
        ln1=stack('ln1'),                              # (L, 1, D) f32
        wi=stack('wi', True),                          # (L, D, F) bf16
        wo_ff=stack('wo_ff', True),                    # (L, F, D) bf16
        ln_final=params['ln_final'],                   # (1, D) f32
        cls_w=cls_w_pad,                               # (D, 128) bf16
        cls_b=cls_b_pad,                               # (1, 128) f32
    )


# ----------------------------------------------------------------------------
# Forward
# ----------------------------------------------------------------------------

def t5_classifier_forward(prep, input_ids, attention_mask, cfg):
    B, S = input_ids.shape
    D, H, dk, F = cfg['d_model'], cfg['num_heads'], cfg['d_kv'], cfg['d_ff']
    L = cfg['num_layers']
    inner = H * dk
    HBS = H * B * S

    # --- embedding gather (glue) ---
    x = jnp.take(prep['embedding'], input_ids, axis=0).astype(jnp.float32)
    x_flat = x.reshape(B * S, D)

    # --- relative position bias + attention mask bias (glue index math) ---
    pos = jnp.arange(S)
    rel = pos[None, :] - pos[:, None]                        # memory - context
    bucket = relative_position_bucket(rel, cfg['rel_buckets'],
                                      cfg['rel_max_distance'])
    pb = jnp.take(prep['rel_attn_bias'], bucket, axis=0)     # (S, S, H)
    pb = jnp.transpose(pb, (2, 0, 1))                        # (H, S, S)
    mask_bias = (1.0 - attention_mask.astype(jnp.float32)) * (-1e9)   # (B, S)
    blk = pb[:, None, :, :] + mask_bias[None, :, None, :]    # (H, B, S, S)
    blk = blk.reshape(H * B, S, S)

    # block-diagonal (HBS, HBS) bias; off-diagonal (cross head / cross batch)
    # blocks are -1e9 so a single big softmax is exact up to underflow.
    bias = jnp.full((HBS, HBS), -1e9, jnp.float32)
    for idx in range(H * B):
        r0 = idx * S
        bias = bias.at[r0:r0 + S, r0:r0 + S].set(blk[idx])

    kernel = _make_fused_kernel(B, S, D, H, dk, F, L, inner)

    out = pl.pallas_call(
        kernel,
        out_shape=jax.ShapeDtypeStruct((B, N_PAD), jnp.float32),
        in_specs=[pl.BlockSpec(memory_space=pltpu.MemorySpace.VMEM)] * 13,
        out_specs=pl.BlockSpec(memory_space=pltpu.MemorySpace.VMEM),
        compiler_params=pltpu.CompilerParams(
            vmem_limit_bytes=32 * 1024 * 1024),
    )(x_flat, bias,
      prep['ln0'], prep['wq'], prep['wk'], prep['wv'], prep['wo'],
      prep['ln1'], prep['wi'], prep['wo_ff'], prep['ln_final'],
      prep['cls_w'], prep['cls_b'])

    # out row b == linear(last_hidden_state[b, 0, :]); trim lane padding
    logits = out[:, :cfg['num_labels']]
    return logits
    # TODO(synk): labels/cross-entropy branch of forward() omitted (loss, not a kernel).


if __name__ == "__main__":
    key = jax.random.PRNGKey(0)
    B, S = 2, 8
    params = build_params(key, CFG)
    prep = prepare_params(params, CFG)

    input_ids = jax.random.randint(jax.random.fold_in(key, 1000), (B, S),
                                   0, CFG['vocab_size'], dtype=jnp.int32)
    attention_mask = jnp.array([[1, 1, 1, 1, 1, 1, 1, 1],
                                [1, 1, 1, 1, 1, 1, 0, 0]], dtype=jnp.int32)

    fwd = jax.jit(functools.partial(t5_classifier_forward, cfg=CFG))
    logits = fwd(prep, input_ids, attention_mask)
    logits = jax.block_until_ready(logits)

    assert logits.shape == (B, CFG['num_labels'])
    assert bool(jnp.all(jnp.isfinite(logits)))
    print("KERNEL_OK")
</pallas_src>

<mosaic_0001>
module attributes {stable_mosaic.version = 11 : i64} {
  func.func @kernel(%arg0: memref<16x32xf32, #tpu.memory_space<vmem>>, %arg1: memref<64x64xf32, #tpu.memory_space<vmem>>, %arg2: memref<2x1x32xf32, #tpu.memory_space<vmem>>, %arg3: memref<2x32x32xbf16, #tpu.memory_space<vmem>>, %arg4: memref<2x32x32xbf16, #tpu.memory_space<vmem>>, %arg5: memref<2x32x32xbf16, #tpu.memory_space<vmem>>, %arg6: memref<2x32x32xbf16, #tpu.memory_space<vmem>>, %arg7: memref<2x1x32xf32, #tpu.memory_space<vmem>>, %arg8: memref<2x32x64xbf16, #tpu.memory_space<vmem>>, %arg9: memref<2x64x32xbf16, #tpu.memory_space<vmem>>, %arg10: memref<1x32xf32, #tpu.memory_space<vmem>>, %arg11: memref<32x128xbf16, #tpu.memory_space<vmem>>, %arg12: memref<1x128xf32, #tpu.memory_space<vmem>>, %arg13: memref<2x128xf32, #tpu.memory_space<vmem>>) attributes {dimension_semantics = [], scalar_prefetch = 0 : i64, scratch_operands = 0 : i64, tpu.core_type = #tpu.core_type<tc>} {
    %c0 = arith.constant 0 : index
    %c0_0 = arith.constant 0 : index
    %0 = vector.load %arg0[%c0, %c0_0] : memref<16x32xf32, #tpu.memory_space<vmem>>, vector<16x32xf32>
    %c0_1 = arith.constant 0 : index
    %c0_2 = arith.constant 0 : index
    %1 = vector.load %arg1[%c0_1, %c0_2] : memref<64x64xf32, #tpu.memory_space<vmem>>, vector<64x64xf32>
    %c0_3 = arith.constant 0 : index
    %c0_4 = arith.constant 0 : index
    %c0_5 = arith.constant 0 : index
    %2 = vector.load %arg2[%c0_3, %c0_4, %c0_5] : memref<2x1x32xf32, #tpu.memory_space<vmem>>, vector<1x1x32xf32>
    %3 = vector.shape_cast %2 : vector<1x1x32xf32> to vector<1x32xf32>
    %4 = arith.mulf %0, %0 : vector<16x32xf32>
    %cst = arith.constant dense<0.000000e+00> : vector<16xf32>
    %5 = vector.multi_reduction <add>, %4, %cst [1] : vector<16x32xf32> to vector<16xf32>
    %6 = vector.shape_cast %5 : vector<16xf32> to vector<16x1xf32>
    %cst_6 = arith.constant 3.200000e+01 : f32
    %7 = vector.broadcast %cst_6 : f32 to vector<16x1xf32>
    %8 = arith.divf %6, %7 : vector<16x1xf32>
    %cst_7 = arith.constant 9.99999997E-7 : f32
    %9 = vector.broadcast %cst_7 : f32 to vector<16x1xf32>
    %10 = arith.addf %8, %9 : vector<16x1xf32>
    %11 = math.rsqrt %10 : vector<16x1xf32>
    %12 = vector.broadcast %11 : vector<16x1xf32> to vector<16x32xf32>
    %13 = arith.mulf %0, %12 : vector<16x32xf32>
    %14 = vector.broadcast %3 : vector<1x32xf32> to vector<16x32xf32>
    %15 = arith.mulf %13, %14 : vector<16x32xf32>
    %c0_8 = arith.constant 0 : index
    %c0_9 = arith.constant 0 : index
    %c0_10 = arith.constant 0 : index
    %16 = vector.load %arg3[%c0_8, %c0_9, %c0_10] : memref<2x32x32xbf16, #tpu.memory_space<vmem>>, vector<1x32x32xbf16>
    %17 = vector.shape_cast %16 : vector<1x32x32xbf16> to vector<32x32xbf16>
    %18 = arith.truncf %15 : vector<16x32xf32> to vector<16x32xbf16>
    %cst_11 = arith.constant dense<0.000000e+00> : vector<16x32xf32>
    %19 = tpu.matmul %18, %17, %cst_11 {dimension_numbers = #tpu.dot_dimension_numbers<[1], [0], [0], [1], [0, 0, 1, 1], [], []>} : vector<16x32xbf16>, vector<32x32xbf16>, vector<16x32xf32> -> vector<16x32xf32>
    %c0_12 = arith.constant 0 : index
    %c0_13 = arith.constant 0 : index
    %c0_14 = arith.constant 0 : index
    %20 = vector.load %arg4[%c0_12, %c0_13, %c0_14] : memref<2x32x32xbf16, #tpu.memory_space<vmem>>, vector<1x32x32xbf16>
    %21 = vector.shape_cast %20 : vector<1x32x32xbf16> to vector<32x32xbf16>
    %22 = arith.truncf %15 : vector<16x32xf32> to vector<16x32xbf16>
    %cst_15 = arith.constant dense<0.000000e+00> : vector<16x32xf32>
    %23 = tpu.matmul %22, %21, %cst_15 {dimension_numbers = #tpu.dot_dimension_numbers<[1], [0], [0], [1], [0, 0, 1, 1], [], []>} : vector<16x32xbf16>, vector<32x32xbf16>, vector<16x32xf32> -> vector<16x32xf32>
    %c0_16 = arith.constant 0 : index
    %c0_17 = arith.constant 0 : index
    %c0_18 = arith.constant 0 : index
    %24 = vector.load %arg5[%c0_16, %c0_17, %c0_18] : memref<2x32x32xbf16, #tpu.memory_space<vmem>>, vector<1x32x32xbf16>
    %25 = vector.shape_cast %24 : vector<1x32x32xbf16> to vector<32x32xbf16>
    %26 = arith.truncf %15 : vector<16x32xf32> to vector<16x32xbf16>
    %cst_19 = arith.constant dense<0.000000e+00> : vector<16x32xf32>
    %27 = tpu.matmul %26, %25, %cst_19 {dimension_numbers = #tpu.dot_dimension_numbers<[1], [0], [0], [1], [0, 0, 1, 1], [], []>} : vector<16x32xbf16>, vector<32x32xbf16>, vector<16x32xf32> -> vector<16x32xf32>
    %28 = vector.extract_strided_slice %19 {offsets = [0, 0], sizes = [16, 8], strides = [1, 1]} : vector<16x32xf32> to vector<16x8xf32>
    %29 = vector.extract_strided_slice %19 {offsets = [0, 8], sizes = [16, 8], strides = [1, 1]} : vector<16x32xf32> to vector<16x8xf32>
    %30 = vector.extract_strided_slice %19 {offsets = [0, 16], sizes = [16, 8], strides = [1, 1]} : vector<16x32xf32> to vector<16x8xf32>
    %31 = vector.extract_strided_slice %19 {offsets = [0, 24], sizes = [16, 8], strides = [1, 1]} : vector<16x32xf32> to vector<16x8xf32>
    %32 = tpu.concatenate %28, %29, %30, %31 in 0 : vector<16x8xf32>, vector<16x8xf32>, vector<16x8xf32>, vector<16x8xf32> -> vector<64x8xf32>
    %33 = vector.extract_strided_slice %23 {offsets = [0, 0], sizes = [16, 8], strides = [1, 1]} : vector<16x32xf32> to vector<16x8xf32>
    %34 = vector.extract_strided_slice %23 {offsets = [0, 8], sizes = [16, 8], strides = [1, 1]} : vector<16x32xf32> to vector<16x8xf32>
    %35 = vector.extract_strided_slice %23 {offsets = [0, 16], sizes = [16, 8], strides = [1, 1]} : vector<16x32xf32> to vector<16x8xf32>
    %36 = vector.extract_strided_slice %23 {offsets = [0, 24], sizes = [16, 8], strides = [1, 1]} : vector<16x32xf32> to vector<16x8xf32>
    %37 = tpu.concatenate %33, %34, %35, %36 in 0 : vector<16x8xf32>, vector<16x8xf32>, vector<16x8xf32>, vector<16x8xf32> -> vector<64x8xf32>
    %38 = vector.extract_strided_slice %27 {offsets = [0, 0], sizes = [16, 8], strides = [1, 1]} : vector<16x32xf32> to vector<16x8xf32>
    %39 = vector.extract_strided_slice %27 {offsets = [0, 8], sizes = [16, 8], strides = [1, 1]} : vector<16x32xf32> to vector<16x8xf32>
    %40 = vector.extract_strided_slice %27 {offsets = [0, 16], sizes = [16, 8], strides = [1, 1]} : vector<16x32xf32> to vector<16x8xf32>
    %41 = vector.extract_strided_slice %27 {offsets = [0, 24], sizes = [16, 8], strides = [1, 1]} : vector<16x32xf32> to vector<16x8xf32>
    %42 = tpu.concatenate %38, %39, %40, %41 in 0 : vector<16x8xf32>, vector<16x8xf32>, vector<16x8xf32>, vector<16x8xf32> -> vector<64x8xf32>
    %43 = arith.truncf %42 : vector<64x8xf32> to vector<64x8xbf16>
    %44 = arith.truncf %32 : vector<64x8xf32> to vector<64x8xbf16>
    %45 = arith.truncf %37 : vector<64x8xf32> to vector<64x8xbf16>
    %cst_20 = arith.constant dense<0.000000e+00> : vector<64x64xf32>
    %46 = tpu.matmul %44, %45, %cst_20 {dimension_numbers = #tpu.dot_dimension_numbers<[1], [1], [0], [0], [0, 0, 1, 0], [], []>} : vector<64x8xbf16>, vector<64x8xbf16>, vector<64x64xf32> -> vector<64x64xf32>
    %47 = arith.addf %46, %1 : vector<64x64xf32>
    %cst_21 = arith.constant dense<0xFF800000> : vector<64xf32>
    %48 = vector.multi_reduction <maximumf>, %47, %cst_21 [1] : vector<64x64xf32> to vector<64xf32>
    %49 = vector.shape_cast %48 : vector<64xf32> to vector<64x1xf32>
    %50 = vector.broadcast %49 : vector<64x1xf32> to vector<64x64xf32>
    %51 = arith.subf %47, %50 : vector<64x64xf32>
    %52 = math.exp %51 : vector<64x64xf32>
    %cst_22 = arith.constant dense<0.000000e+00> : vector<64xf32>
    %53 = vector.multi_reduction <add>, %52, %cst_22 [1] : vector<64x64xf32> to vector<64xf32>
    %54 = vector.shape_cast %53 : vector<64xf32> to vector<64x1xf32>
    %55 = tpu.reciprocal %54 {approx = true} : vector<64x1xf32> -> vector<64x1xf32>
    %56 = vector.broadcast %55 : vector<64x1xf32> to vector<64x64xf32>
    %57 = arith.mulf %52, %56 : vector<64x64xf32>
    %58 = arith.truncf %57 : vector<64x64xf32> to vector<64x64xbf16>
    %cst_23 = arith.constant dense<0.000000e+00> : vector<64x8xf32>
    %59 = tpu.matmul %58, %43, %cst_23 {dimension_numbers = #tpu.dot_dimension_numbers<[1], [0], [0], [1], [0, 0, 1, 1], [], []>} : vector<64x64xbf16>, vector<64x8xbf16>, vector<64x8xf32> -> vector<64x8xf32>
    %60 = vector.extract_strided_slice %59 {offsets = [0, 0], sizes = [16, 8], strides = [1, 1]} : vector<64x8xf32> to vector<16x8xf32>
    %61 = vector.extract_strided_slice %59 {offsets = [16, 0], sizes = [16, 8], strides = [1, 1]} : vector<64x8xf32> to vector<16x8xf32>
    %62 = vector.extract_strided_slice %59 {offsets = [32, 0], sizes = [16, 8], strides = [1, 1]} : vector<64x8xf32> to vector<16x8xf32>
    %63 = vector.extract_strided_slice %59 {offsets = [48, 0], sizes = [16, 8], strides = [1, 1]} : vector<64x8xf32> to vector<16x8xf32>
    %64 = tpu.concatenate %60, %61, %62, %63 in 1 : vector<16x8xf32>, vector<16x8xf32>, vector<16x8xf32>, vector<16x8xf32> -> vector<16x32xf32>
    %c0_24 = arith.constant 0 : index
    %c0_25 = arith.constant 0 : index
    %c0_26 = arith.constant 0 : index
    %65 = vector.load %arg6[%c0_24, %c0_25, %c0_26] : memref<2x32x32xbf16, #tpu.memory_space<vmem>>, vector<1x32x32xbf16>
    %66 = vector.shape_cast %65 : vector<1x32x32xbf16> to vector<32x32xbf16>
    %67 = arith.truncf %64 : vector<16x32xf32> to vector<16x32xbf16>
    %cst_27 = arith.constant dense<0.000000e+00> : vector<16x32xf32>
    %68 = tpu.matmul %67, %66, %cst_27 {dimension_numbers = #tpu.dot_dimension_numbers<[1], [0], [0], [1], [0, 0, 1, 1], [], []>} : vector<16x32xbf16>, vector<32x32xbf16>, vector<16x32xf32> -> vector<16x32xf32>
    %69 = arith.addf %0, %68 : vector<16x32xf32>
    %c0_28 = arith.constant 0 : index
    %c0_29 = arith.constant 0 : index
    %c0_30 = arith.constant 0 : index
    %70 = vector.load %arg7[%c0_28, %c0_29, %c0_30] : memref<2x1x32xf32, #tpu.memory_space<vmem>>, vector<1x1x32xf32>
    %71 = vector.shape_cast %70 : vector<1x1x32xf32> to vector<1x32xf32>
    %72 = arith.mulf %69, %69 : vector<16x32xf32>
    %cst_31 = arith.constant dense<0.000000e+00> : vector<16xf32>
    %73 = vector.multi_reduction <add>, %72, %cst_31 [1] : vector<16x32xf32> to vector<16xf32>
    %74 = vector.shape_cast %73 : vector<16xf32> to vector<16x1xf32>
    %cst_32 = arith.constant 3.200000e+01 : f32
    %75 = vector.broadcast %cst_32 : f32 to vector<16x1xf32>
    %76 = arith.divf %74, %75 : vector<16x1xf32>
    %cst_33 = arith.constant 9.99999997E-7 : f32
    %77 = vector.broadcast %cst_33 : f32 to vector<16x1xf32>
    %78 = arith.addf %76, %77 : vector<16x1xf32>
    %79 = math.rsqrt %78 : vector<16x1xf32>
    %80 = vector.broadcast %79 : vector<16x1xf32> to vector<16x32xf32>
    %81 = arith.mulf %69, %80 : vector<16x32xf32>
    %82 = vector.broadcast %71 : vector<1x32xf32> to vector<16x32xf32>
    %83 = arith.mulf %81, %82 : vector<16x32xf32>
    %c0_34 = arith.constant 0 : index
    %c0_35 = arith.constant 0 : index
    %c0_36 = arith.constant 0 : index
    %84 = vector.load %arg8[%c0_34, %c0_35, %c0_36] : memref<2x32x64xbf16, #tpu.memory_space<vmem>>, vector<1x32x64xbf16>
    %85 = vector.shape_cast %84 : vector<1x32x64xbf16> to vector<32x64xbf16>
    %86 = arith.truncf %83 : vector<16x32xf32> to vector<16x32xbf16>
    %cst_37 = arith.constant dense<0.000000e+00> : vector<16x64xf32>
    %87 = tpu.matmul %86, %85, %cst_37 {dimension_numbers = #tpu.dot_dimension_numbers<[1], [0], [0], [1], [0, 0, 1, 1], [], []>} : vector<16x32xbf16>, vector<32x64xbf16>, vector<16x64xf32> -> vector<16x64xf32>
    %cst_38 = arith.constant 0.000000e+00 : f32
    %88 = vector.broadcast %cst_38 : f32 to vector<16x64xf32>
    %89 = arith.maximumf %87, %88 : vector<16x64xf32>
    %c0_39 = arith.constant 0 : index
    %c0_40 = arith.constant 0 : index
    %c0_41 = arith.constant 0 : index
    %90 = vector.load %arg9[%c0_39, %c0_40, %c0_41] : memref<2x64x32xbf16, #tpu.memory_space<vmem>>, vector<1x64x32xbf16>
    %91 = vector.shape_cast %90 : vector<1x64x32xbf16> to vector<64x32xbf16>
    %92 = arith.truncf %89 : vector<16x64xf32> to vector<16x64xbf16>
    %cst_42 = arith.constant dense<0.000000e+00> : vector<16x32xf32>
    %93 = tpu.matmul %92, %91, %cst_42 {dimension_numbers = #tpu.dot_dimension_numbers<[1], [0], [0], [1], [0, 0, 1, 1], [], []>} : vector<16x64xbf16>, vector<64x32xbf16>, vector<16x32xf32> -> vector<16x32xf32>
    %94 = arith.addf %69, %93 : vector<16x32xf32>
    %c1 = arith.constant 1 : index
    %c0_43 = arith.constant 0 : index
    %c0_44 = arith.constant 0 : index
    %95 = vector.load %arg2[%c1, %c0_43, %c0_44] : memref<2x1x32xf32, #tpu.memory_space<vmem>>, vector<1x1x32xf32>
    %96 = vector.shape_cast %95 : vector<1x1x32xf32> to vector<1x32xf32>
    %97 = arith.mulf %94, %94 : vector<16x32xf32>
    %cst_45 = arith.constant dense<0.000000e+00> : vector<16xf32>
    %98 = vector.multi_reduction <add>, %97, %cst_45 [1] : vector<16x32xf32> to vector<16xf32>
    %99 = vector.shape_cast %98 : vector<16xf32> to vector<16x1xf32>
    %cst_46 = arith.constant 3.200000e+01 : f32
    %100 = vector.broadcast %cst_46 : f32 to vector<16x1xf32>
    %101 = arith.divf %99, %100 : vector<16x1xf32>
    %cst_47 = arith.constant 9.99999997E-7 : f32
    %102 = vector.broadcast %cst_47 : f32 to vector<16x1xf32>
    %103 = arith.addf %101, %102 : vector<16x1xf32>
    %104 = math.rsqrt %103 : vector<16x1xf32>
    %105 = vector.broadcast %104 : vector<16x1xf32> to vector<16x32xf32>
    %106 = arith.mulf %94, %105 : vector<16x32xf32>
    %107 = vector.broadcast %96 : vector<1x32xf32> to vector<16x32xf32>
    %108 = arith.mulf %106, %107 : vector<16x32xf32>
    %c1_48 = arith.constant 1 : index
    %c0_49 = arith.constant 0 : index
    %c0_50 = arith.constant 0 : index
    %109 = vector.load %arg3[%c1_48, %c0_49, %c0_50] : memref<2x32x32xbf16, #tpu.memory_space<vmem>>, vector<1x32x32xbf16>
    %110 = vector.shape_cast %109 : vector<1x32x32xbf16> to vector<32x32xbf16>
    %111 = arith.truncf %108 : vector<16x32xf32> to vector<16x32xbf16>
    %cst_51 = arith.constant dense<0.000000e+00> : vector<16x32xf32>
    %112 = tpu.matmul %111, %110, %cst_51 {dimension_numbers = #tpu.dot_dimension_numbers<[1], [0], [0], [1], [0, 0, 1, 1], [], []>} : vector<16x32xbf16>, vector<32x32xbf16>, vector<16x32xf32> -> vector<16x32xf32>
    %c1_52 = arith.constant 1 : index
    %c0_53 = arith.constant 0 : index
    %c0_54 = arith.constant 0 : index
    %113 = vector.load %arg4[%c1_52, %c0_53, %c0_54] : memref<2x32x32xbf16, #tpu.memory_space<vmem>>, vector<1x32x32xbf16>
    %114 = vector.shape_cast %113 : vector<1x32x32xbf16> to vector<32x32xbf16>
    %115 = arith.truncf %108 : vector<16x32xf32> to vector<16x32xbf16>
    %cst_55 = arith.constant dense<0.000000e+00> : vector<16x32xf32>
    %116 = tpu.matmul %115, %114, %cst_55 {dimension_numbers = #tpu.dot_dimension_numbers<[1], [0], [0], [1], [0, 0, 1, 1], [], []>} : vector<16x32xbf16>, vector<32x32xbf16>, vector<16x32xf32> -> vector<16x32xf32>
    %c1_56 = arith.constant 1 : index
    %c0_57 = arith.constant 0 : index
    %c0_58 = arith.constant 0 : index
    %117 = vector.load %arg5[%c1_56, %c0_57, %c0_58] : memref<2x32x32xbf16, #tpu.memory_space<vmem>>, vector<1x32x32xbf16>
    %118 = vector.shape_cast %117 : vector<1x32x32xbf16> to vector<32x32xbf16>
    %119 = arith.truncf %108 : vector<16x32xf32> to vector<16x32xbf16>
    %cst_59 = arith.constant dense<0.000000e+00> : vector<16x32xf32>
    %120 = tpu.matmul %119, %118, %cst_59 {dimension_numbers = #tpu.dot_dimension_numbers<[1], [0], [0], [1], [0, 0, 1, 1], [], []>} : vector<16x32xbf16>, vector<32x32xbf16>, vector<16x32xf32> -> vector<16x32xf32>
    %121 = vector.extract_strided_slice %112 {offsets = [0, 0], sizes = [16, 8], strides = [1, 1]} : vector<16x32xf32> to vector<16x8xf32>
    %122 = vector.extract_strided_slice %112 {offsets = [0, 8], sizes = [16, 8], strides = [1, 1]} : vector<16x32xf32> to vector<16x8xf32>
    %123 = vector.extract_strided_slice %112 {offsets = [0, 16], sizes = [16, 8], strides = [1, 1]} : vector<16x32xf32> to vector<16x8xf32>
    %124 = vector.extract_strided_slice %112 {offsets = [0, 24], sizes = [16, 8], strides = [1, 1]} : vector<16x32xf32> to vector<16x8xf32>
    %125 = tpu.concatenate %121, %122, %123, %124 in 0 : vector<16x8xf32>, vector<16x8xf32>, vector<16x8xf32>, vector<16x8xf32> -> vector<64x8xf32>
    %126 = vector.extract_strided_slice %116 {offsets = [0, 0], sizes = [16, 8], strides = [1, 1]} : vector<16x32xf32> to vector<16x8xf32>
    %127 = vector.extract_strided_slice %116 {offsets = [0, 8], sizes = [16, 8], strides = [1, 1]} : vector<16x32xf32> to vector<16x8xf32>
    %128 = vector.extract_strided_slice %116 {offsets = [0, 16], sizes = [16, 8], strides = [1, 1]} : vector<16x32xf32> to vector<16x8xf32>
    %129 = vector.extract_strided_slice %116 {offsets = [0, 24], sizes = [16, 8], strides = [1, 1]} : vector<16x32xf32> to vector<16x8xf32>
    %130 = tpu.concatenate %126, %127, %128, %129 in 0 : vector<16x8xf32>, vector<16x8xf32>, vector<16x8xf32>, vector<16x8xf32> -> vector<64x8xf32>
    %131 = vector.extract_strided_slice %120 {offsets = [0, 0], sizes = [16, 8], strides = [1, 1]} : vector<16x32xf32> to vector<16x8xf32>
    %132 = vector.extract_strided_slice %120 {offsets = [0, 8], sizes = [16, 8], strides = [1, 1]} : vector<16x32xf32> to vector<16x8xf32>
    %133 = vector.extract_strided_slice %120 {offsets = [0, 16], sizes = [16, 8], strides = [1, 1]} : vector<16x32xf32> to vector<16x8xf32>
    %134 = vector.extract_strided_slice %120 {offsets = [0, 24], sizes = [16, 8], strides = [1, 1]} : vector<16x32xf32> to vector<16x8xf32>
    %135 = tpu.concatenate %131, %132, %133, %134 in 0 : vector<16x8xf32>, vector<16x8xf32>, vector<16x8xf32>, vector<16x8xf32> -> vector<64x8xf32>
    %136 = arith.truncf %135 : vector<64x8xf32> to vector<64x8xbf16>
    %137 = arith.truncf %125 : vector<64x8xf32> to vector<64x8xbf16>
    %138 = arith.truncf %130 : vector<64x8xf32> to vector<64x8xbf16>
    %cst_60 = arith.constant dense<0.000000e+00> : vector<64x64xf32>
    %139 = tpu.matmul %137, %138, %cst_60 {dimension_numbers = #tpu.dot_dimension_numbers<[1], [1], [0], [0], [0, 0, 1, 0], [], []>} : vector<64x8xbf16>, vector<64x8xbf16>, vector<64x64xf32> -> vector<64x64xf32>
    %140 = arith.addf %139, %1 : vector<64x64xf32>
    %cst_61 = arith.constant dense<0xFF800000> : vector<64xf32>
    %141 = vector.multi_reduction <maximumf>, %140, %cst_61 [1] : vector<64x64xf32> to vector<64xf32>
    %142 = vector.shape_cast %141 : vector<64xf32> to vector<64x1xf32>
    %143 = vector.broadcast %142 : vector<64x1xf32> to vector<64x64xf32>
    %144 = arith.subf %140, %143 : vector<64x64xf32>
    %145 = math.exp %144 : vector<64x64xf32>
    %cst_62 = arith.constant dense<0.000000e+00> : vector<64xf32>
    %146 = vector.multi_reduction <add>, %145, %cst_62 [1] : vector<64x64xf32> to vector<64xf32>
    %147 = vector.shape_cast %146 : vector<64xf32> to vector<64x1xf32>
    %148 = tpu.reciprocal %147 {approx = true} : vector<64x1xf32> -> vector<64x1xf32>
    %149 = vector.broadcast %148 : vector<64x1xf32> to vector<64x64xf32>
    %150 = arith.mulf %145, %149 : vector<64x64xf32>
    %151 = arith.truncf %150 : vector<64x64xf32> to vector<64x64xbf16>
    %cst_63 = arith.constant dense<0.000000e+00> : vector<64x8xf32>
    %152 = tpu.matmul %151, %136, %cst_63 {dimension_numbers = #tpu.dot_dimension_numbers<[1], [0], [0], [1], [0, 0, 1, 1], [], []>} : vector<64x64xbf16>, vector<64x8xbf16>, vector<64x8xf32> -> vector<64x8xf32>
    %153 = vector.extract_strided_slice %152 {offsets = [0, 0], sizes = [16, 8], strides = [1, 1]} : vector<64x8xf32> to vector<16x8xf32>
    %154 = vector.extract_strided_slice %152 {offsets = [16, 0], sizes = [16, 8], strides = [1, 1]} : vector<64x8xf32> to vector<16x8xf32>
    %155 = vector.extract_strided_slice %152 {offsets = [32, 0], sizes = [16, 8], strides = [1, 1]} : vector<64x8xf32> to vector<16x8xf32>
    %156 = vector.extract_strided_slice %152 {offsets = [48, 0], sizes = [16, 8], strides = [1, 1]} : vector<64x8xf32> to vector<16x8xf32>
    %157 = tpu.concatenate %153, %154, %155, %156 in 1 : vector<16x8xf32>, vector<16x8xf32>, vector<16x8xf32>, vector<16x8xf32> -> vector<16x32xf32>
    %c1_64 = arith.constant 1 : index
    %c0_65 = arith.constant 0 : index
    %c0_66 = arith.constant 0 : index
    %158 = vector.load %arg6[%c1_64, %c0_65, %c0_66] : memref<2x32x32xbf16, #tpu.memory_space<vmem>>, vector<1x32x32xbf16>
    %159 = vector.shape_cast %158 : vector<1x32x32xbf16> to vector<32x32xbf16>
    %160 = arith.truncf %157 : vector<16x32xf32> to vector<16x32xbf16>
    %cst_67 = arith.constant dense<0.000000e+00> : vector<16x32xf32>
    %161 = tpu.matmul %160, %159, %cst_67 {dimension_numbers = #tpu.dot_dimension_numbers<[1], [0], [0], [1], [0, 0, 1, 1], [], []>} : vector<16x32xbf16>, vector<32x32xbf16>, vector<16x32xf32> -> vector<16x32xf32>
    %162 = arith.addf %94, %161 : vector<16x32xf32>
    %c1_68 = arith.constant 1 : index
    %c0_69 = arith.constant 0 : index
    %c0_70 = arith.constant 0 : index
    %163 = vector.load %arg7[%c1_68, %c0_69, %c0_70] : memref<2x1x32xf32, #tpu.memory_space<vmem>>, vector<1x1x32xf32>
    %164 = vector.shape_cast %163 : vector<1x1x32xf32> to vector<1x32xf32>
    %165 = arith.mulf %162, %162 : vector<16x32xf32>
    %cst_71 = arith.constant dense<0.000000e+00> : vector<16xf32>
    %166 = vector.multi_reduction <add>, %165, %cst_71 [1] : vector<16x32xf32> to vector<16xf32>
    %167 = vector.shape_cast %166 : vector<16xf32> to vector<16x1xf32>
    %cst_72 = arith.constant 3.200000e+01 : f32
    %168 = vector.broadcast %cst_72 : f32 to vector<16x1xf32>
    %169 = arith.divf %167, %168 : vector<16x1xf32>
    %cst_73 = arith.constant 9.99999997E-7 : f32
    %170 = vector.broadcast %cst_73 : f32 to vector<16x1xf32>
    %171 = arith.addf %169, %170 : vector<16x1xf32>
    %172 = math.rsqrt %171 : vector<16x1xf32>
    %173 = vector.broadcast %172 : vector<16x1xf32> to vector<16x32xf32>
    %174 = arith.mulf %162, %173 : vector<16x32xf32>
    %175 = vector.broadcast %164 : vector<1x32xf32> to vector<16x32xf32>
    %176 = arith.mulf %174, %175 : vector<16x32xf32>
    %c1_74 = arith.constant 1 : index
    %c0_75 = arith.constant 0 : index
    %c0_76 = arith.constant 0 : index
    %177 = vector.load %arg8[%c1_74, %c0_75, %c0_76] : memref<2x32x64xbf16, #tpu.memory_space<vmem>>, vector<1x32x64xbf16>
    %178 = vector.shape_cast %177 : vector<1x32x64xbf16> to vector<32x64xbf16>
    %179 = arith.truncf %176 : vector<16x32xf32> to vector<16x32xbf16>
    %cst_77 = arith.constant dense<0.000000e+00> : vector<16x64xf32>
    %180 = tpu.matmul %179, %178, %cst_77 {dimension_numbers = #tpu.dot_dimension_numbers<[1], [0], [0], [1], [0, 0, 1, 1], [], []>} : vector<16x32xbf16>, vector<32x64xbf16>, vector<16x64xf32> -> vector<16x64xf32>
    %cst_78 = arith.constant 0.000000e+00 : f32
    %181 = vector.broadcast %cst_78 : f32 to vector<16x64xf32>
    %182 = arith.maximumf %180, %181 : vector<16x64xf32>
    %c1_79 = arith.constant 1 : index
    %c0_80 = arith.constant 0 : index
    %c0_81 = arith.constant 0 : index
    %183 = vector.load %arg9[%c1_79, %c0_80, %c0_81] : memref<2x64x32xbf16, #tpu.memory_space<vmem>>, vector<1x64x32xbf16>
    %184 = vector.shape_cast %183 : vector<1x64x32xbf16> to vector<64x32xbf16>
    %185 = arith.truncf %182 : vector<16x64xf32> to vector<16x64xbf16>
    %cst_82 = arith.constant dense<0.000000e+00> : vector<16x32xf32>
    %186 = tpu.matmul %185, %184, %cst_82 {dimension_numbers = #tpu.dot_dimension_numbers<[1], [0], [0], [1], [0, 0, 1, 1], [], []>} : vector<16x64xbf16>, vector<64x32xbf16>, vector<16x32xf32> -> vector<16x32xf32>
    %187 = arith.addf %162, %186 : vector<16x32xf32>
    %188 = vector.extract_strided_slice %187 {offsets = [0, 0], sizes = [1, 32], strides = [1, 1]} : vector<16x32xf32> to vector<1x32xf32>
    %189 = vector.extract_strided_slice %187 {offsets = [8, 0], sizes = [1, 32], strides = [1, 1]} : vector<16x32xf32> to vector<1x32xf32>
    %190 = tpu.concatenate %188, %189 in 0 : vector<1x32xf32>, vector<1x32xf32> -> vector<2x32xf32>
    %c0_83 = arith.constant 0 : index
    %c0_84 = arith.constant 0 : index
    %191 = vector.load %arg10[%c0_83, %c0_84] : memref<1x32xf32, #tpu.memory_space<vmem>>, vector<1x32xf32>
    %192 = arith.mulf %190, %190 : vector<2x32xf32>
    %cst_85 = arith.constant dense<0.000000e+00> : vector<2xf32>
    %193 = vector.multi_reduction <add>, %192, %cst_85 [1] : vector<2x32xf32> to vector<2xf32>
    %194 = vector.shape_cast %193 : vector<2xf32> to vector<2x1xf32>
    %cst_86 = arith.constant 3.200000e+01 : f32
    %195 = vector.broadcast %cst_86 : f32 to vector<2x1xf32>
    %196 = arith.divf %194, %195 : vector<2x1xf32>
    %cst_87 = arith.constant 9.99999997E-7 : f32
    %197 = vector.broadcast %cst_87 : f32 to vector<2x1xf32>
    %198 = arith.addf %196, %197 : vector<2x1xf32>
    %199 = math.rsqrt %198 : vector<2x1xf32>
    %200 = vector.broadcast %199 : vector<2x1xf32> to vector<2x32xf32>
    %201 = arith.mulf %190, %200 : vector<2x32xf32>
    %202 = vector.broadcast %191 : vector<1x32xf32> to vector<2x32xf32>
    %203 = arith.mulf %201, %202 : vector<2x32xf32>
    %c0_88 = arith.constant 0 : index
    %c0_89 = arith.constant 0 : index
    %204 = vector.load %arg11[%c0_88, %c0_89] : memref<32x128xbf16, #tpu.memory_space<vmem>>, vector<32x128xbf16>
    %205 = arith.truncf %203 : vector<2x32xf32> to vector<2x32xbf16>
    %cst_90 = arith.constant dense<0.000000e+00> : vector<2x128xf32>
    %206 = tpu.matmul %205, %204, %cst_90 {dimension_numbers = #tpu.dot_dimension_numbers<[1], [0], [0], [1], [0, 0, 1, 1], [], []>} : vector<2x32xbf16>, vector<32x128xbf16>, vector<2x128xf32> -> vector<2x128xf32>
    %c0_91 = arith.constant 0 : index
    %c0_92 = arith.constant 0 : index
    %207 = vector.load %arg12[%c0_91, %c0_92] : memref<1x128xf32, #tpu.memory_space<vmem>>, vector<1x128xf32>
    %208 = vector.broadcast %207 : vector<1x128xf32> to vector<2x128xf32>
    %209 = arith.addf %206, %208 : vector<2x128xf32>
    %c0_93 = arith.constant 0 : index
    %c0_94 = arith.constant 0 : index
    %210 = vector.load %arg13[%c0_93, %c0_94] : memref<2x128xf32, #tpu.memory_space<vmem>>, vector<2x128xf32>
    tpu.vector_store %arg13[%c0_93, %c0_94], %209 {strides = array<i32>} : memref<2x128xf32, #tpu.memory_space<vmem>>, vector<2x128xf32>,
    return
  }
}

</mosaic_0001>

<llo_original>
// kernel: t5_classifier_forward.1
$region0: #{t5_classifier_forward.1}
  #allocation0 [shape = 'u32[]', space=smem, size = 0x4, offset = 0x4, fixed_abs, tag = 'smem constant byte address 0x4 - core index']
  #allocation1 [shape = 'u32[144,128]{1,0:T(1,128)}', space=vmem, size = 0x12000, scoped, tag = 'internal scratch']
  %s0 = inlined_call_operand.vmem [shape: f32[16,32], index: 0, kind: input, shape index: {}]
  %s1 = inlined_call_operand.vmem [shape: f32[64,64], index: 1, kind: input, shape index: {}]
  %s2 = inlined_call_operand.vmem [shape: f32[2,1,32], index: 2, kind: input, shape index: {}]
  %s3 = inlined_call_operand.vmem [shape: bf16[2,32,32], index: 3, kind: input, shape index: {}]
  %s4 = inlined_call_operand.vmem [shape: bf16[2,32,32], index: 4, kind: input, shape index: {}]
  %s5 = inlined_call_operand.vmem [shape: bf16[2,32,32], index: 5, kind: input, shape index: {}]
  %s6 = inlined_call_operand.vmem [shape: bf16[2,32,32], index: 6, kind: input, shape index: {}]
  %s7 = inlined_call_operand.vmem [shape: f32[2,1,32], index: 7, kind: input, shape index: {}]
  %s8 = inlined_call_operand.vmem [shape: bf16[2,32,64], index: 8, kind: input, shape index: {}]
  %s9 = inlined_call_operand.vmem [shape: bf16[2,64,32], index: 9, kind: input, shape index: {}]
  %s10 = inlined_call_operand.vmem [shape: f32[1,32], index: 10, kind: input, shape index: {}]
  %s11 = inlined_call_operand.vmem [shape: bf16[32,128], index: 11, kind: input, shape index: {}]
  %s12 = inlined_call_operand.vmem [shape: f32[1,128], index: 12, kind: input, shape index: {}]
  %s13 = inlined_call_operand.hbm [shape: f32[2,128], index: 13, kind: output, shape index: {}]
  %s14 = sld [smem:[#allocation0]]
  $region62: #{t5_classifier_forward.1} parent=0
    _
  %s16 = ssub.s32 1, %s14
  %s17 = scalar_select 0, %s16, %s14
  $region1: #{t5_classifier_forward.1} parent=0
    #allocation2 [shape = 'u8[1024]{0}', space=vmem, size = 0x400, scoped, tag = 'output window, operand 0, single buffered']
    #allocation3 [shape = 's32[1]{0}', space=sflag, size = 0x4, scoped, tag = 'scoped memory for t5_classifier_forward.1']
    %18 = vsyncpa [#allocation3], 0
    // Predicated region
    $region2: #{t5_classifier_forward.1} parent=1 // pred_check
      _
    $region3: #{t5_classifier_forward.1} parent=1 // pred_check_branch
      %20 = sbr.rel (0) target = $region5
    $region4: #{t5_classifier_forward.1} parent=1 // pred_region
      _
    $region5: #{t5_classifier_forward.1} parent=1 // pred_fallthru
      _
    // Predicated region
    $region6: #{t5_classifier_forward.1} parent=1 // pred_check
      _
    $region7: #{t5_classifier_forward.1} parent=1 // pred_check_branch
      %22 = sbr.rel (0) target = $region9
    $region8: #{t5_classifier_forward.1} parent=1 // pred_region
      _
    $region9: #{t5_classifier_forward.1} parent=1 // pred_fallthru
      _
    // Predicated region
    $region10: #{t5_classifier_forward.1} parent=1 // pred_check
      _
    $region11: #{t5_classifier_forward.1} parent=1 // pred_check_branch
      %24 = sbr.rel (0) target = $region13
    $region12: #{t5_classifier_forward.1} parent=1 // pred_region
      _
    $region13: #{t5_classifier_forward.1} parent=1 // pred_fallthru
      _
    // Predicated region
    $region14: #{t5_classifier_forward.1} parent=1 // pred_check
      _
    $region15: #{t5_classifier_forward.1} parent=1 // pred_check_branch
      %26 = sbr.rel (0) target = $region17
    $region16: #{t5_classifier_forward.1} parent=1 // pred_region
      _
    $region17: #{t5_classifier_forward.1} parent=1 // pred_fallthru
      _
    // Predicated region
    $region18: #{t5_classifier_forward.1} parent=1 // pred_check
      _
    $region19: #{t5_classifier_forward.1} parent=1 // pred_check_branch
      %28 = sbr.rel (0) target = $region21
    $region20: #{t5_classifier_forward.1} parent=1 // pred_region
      _
    $region21: #{t5_classifier_forward.1} parent=1 // pred_fallthru
      _
    // Predicated region
    $region22: #{t5_classifier_forward.1} parent=1 // pred_check
      _
    $region23: #{t5_classifier_forward.1} parent=1 // pred_check_branch
      %30 = sbr.rel (0) target = $region25
    $region24: #{t5_classifier_forward.1} parent=1 // pred_region
      _
    $region25: #{t5_classifier_forward.1} parent=1 // pred_fallthru
      _
    // Predicated region
    $region26: #{t5_classifier_forward.1} parent=1 // pred_check
      _
    $region27: #{t5_classifier_forward.1} parent=1 // pred_check_branch
      %32 = sbr.rel (0) target = $region29
    $region28: #{t5_classifier_forward.1} parent=1 // pred_region
      _
    $region29: #{t5_classifier_forward.1} parent=1 // pred_fallthru
      _
    // Predicated region
    $region30: #{t5_classifier_forward.1} parent=1 // pred_check
      _
    $region31: #{t5_classifier_forward.1} parent=1 // pred_check_branch
      %34 = sbr.rel (0) target = $region33
    $region32: #{t5_classifier_forward.1} parent=1 // pred_region
      _
    $region33: #{t5_classifier_forward.1} parent=1 // pred_fallthru
      _
    // Predicated region
    $region34: #{t5_classifier_forward.1} parent=1 // pred_check
      _
    $region35: #{t5_classifier_forward.1} parent=1 // pred_check_branch
      %36 = sbr.rel (0) target = $region37
    $region36: #{t5_classifier_forward.1} parent=1 // pred_region
      _
    $region37: #{t5_classifier_forward.1} parent=1 // pred_fallthru
      _
    // Predicated region
    $region38: #{t5_classifier_forward.1} parent=1 // pred_check
      _
    $region39: #{t5_classifier_forward.1} parent=1 // pred_check_branch
      %38 = sbr.rel (0) target = $region41
    $region40: #{t5_classifier_forward.1} parent=1 // pred_region
      _
    $region41: #{t5_classifier_forward.1} parent=1 // pred_fallthru
      _
    // Predicated region
    $region42: #{t5_classifier_forward.1} parent=1 // pred_check
      _
    $region43: #{t5_classifier_forward.1} parent=1 // pred_check_branch
      %40 = sbr.rel (0) target = $region45
    $region44: #{t5_classifier_forward.1} parent=1 // pred_region
      _
    $region45: #{t5_classifier_forward.1} parent=1 // pred_fallthru
      _
    // Predicated region
    $region46: #{t5_classifier_forward.1} parent=1 // pred_check
      _
    $region47: #{t5_classifier_forward.1} parent=1 // pred_check_branch
      %42 = sbr.rel (0) target = $region49
    $region48: #{t5_classifier_forward.1} parent=1 // pred_region
      _
    $region49: #{t5_classifier_forward.1} parent=1 // pred_fallthru
      _
    // Predicated region
    $region50: #{t5_classifier_forward.1} parent=1 // pred_check
      _
    $region51: #{t5_classifier_forward.1} parent=1 // pred_check_branch
      %44 = sbr.rel (0) target = $region53
    $region52: #{t5_classifier_forward.1} parent=1 // pred_region
      _
    $region53: #{t5_classifier_forward.1} parent=1 // pred_fallthru
      _
    %v46 = vld [vmem:[%s0] sm:$0xff]
    %v47 = vld [vmem:[%s0 + $0x8] sm:$0xff]
    %v48 = vld [vmem:[%s1] sm:$0xff]
    %v49 = vld [vmem:[%s1 + $0x8] sm:$0xff]
    %v50 = vld [vmem:[%s1 + $0x10] sm:$0xff]
    %v51 = vld [vmem:[%s1 + $0x18] sm:$0xff]
    %v52 = vld [vmem:[%s1 + $0x20] sm:$0xff]
    %v53 = vld [vmem:[%s1 + $0x28] sm:$0xff]
    %v54 = vld [vmem:[%s1 + $0x30] sm:$0xff]
    %v55 = vld [vmem:[%s1 + $0x38] sm:$0xff]
    %v56 = vld [vmem:[%s2] sm:$0x1]
    %v57 = vmul.f32 %v46, %v46
    %v58 = vmul.f32 %v47, %v47
    %vm59 = vcmask 261120
    %v60 = vsel %vm59, %v57, 0.0
    %61 = vadd.xlane.f32.xlu0 %v60
    %v62 = vpop.xlane.xlu0 %61
    %v63 = vsel %vm59, %v58, 0.0
    %64 = vadd.xlane.f32.xlu0 %v63
    %v65 = vpop.xlane.xlu0 %64
    %v66 = vrcp.pop 32.0
    %v67 = vmul.f32 %v62, %v66
    %v68 = vmul.f32 %v65, %v66
    %v69 = vadd.f32 %v67, 1e-06
    %v70 = vadd.f32 %v68, 1e-06
    %v71 = vrsqrt.pop %v69
    %v72 = vrsqrt.pop %v70
    %v73 = vmul.f32 %v46, %v71
    %v74 = vmul.f32 %v47, %v72
    %v76 = vlaneseq
    %v77 = vshrl.u32 %v76, 7
    %v78 = vsub.s32 0, %v77
    %v79 = vrot.slane %v56, %v78
    %v81 = vmul.f32 %v73, %v79
    %v82 = vmul.f32 %v74, %v79
    %v83 = vld [vmem:[%s3] sm:$0xf]
    %v84 = vld [vmem:[%s3 + $0x4] sm:$0xf]
    %v85 = vld [vmem:[%s3 + $0x8] sm:$0xf]
    %v86 = vld [vmem:[%s3 + $0xc] sm:$0xf]
    %v87 = vpack.c.bf16 %v82, %v81
    %v92 = vunpack.c.l.b16 %v83
    %v93 = vunpack.c.l.b16 %v84
    %v94 = vunpack.c.l.b16 %v85
    %v95 = vunpack.c.l.b16 %v86
    %v96 = vpack.c.b16 %v93, %v92
    %v97 = vpack.c.b16 %v95, %v94
    %v101 = vsel %vm59, %v87, 0
    %103 = vmatprep.subr.bf16.mxu0 0
    %104 = vmatpush1.bf16.msra.mxu0 %v96
    %105 = vmatprep.subr.bf16.mxu0 0
    %106 = vmatpush1.bf16.msra.mxu0 %v97
    %107 = vmatprep.subr.bf16.mxu0 0
    %108 = vmatpush1.bf16.msra.mxu0 0
    %109 = vmatprep.subr.bf16.mxu0 0
    %110 = vmatpush1.bf16.msra.mxu0 0
    %111 = vmatprep.subr.bf16.mxu0 0
    %112 = vmatpush1.bf16.msra.mxu0 0
    %113 = vmatprep.subr.bf16.mxu0 0
    %114 = vmatpush1.bf16.msra.mxu0 0
    %115 = vmatprep.subr.bf16.mxu0 0
    %116 = vmatpush1.bf16.msra.mxu0 0
    %117 = vmatprep.subr.bf16.mxu0 0
    %118 = vmatpush1.bf16.msra.mxu0 0
    %119 = vmatprep.subr.bf16.mxu0 0
    %120 = vmatpush1.bf16.msra.mxu0 0
    %121 = vmatprep.subr.bf16.mxu0 0
    %122 = vmatpush1.bf16.msra.mxu0 0
    %123 = vmatprep.subr.bf16.mxu0 0
    %124 = vmatpush1.bf16.msra.mxu0 0
    %125 = vmatprep.subr.bf16.mxu0 0
    %126 = vmatpush1.bf16.msra.mxu0 0
    %127 = vmatprep.subr.bf16.mxu0 0
    %128 = vmatpush1.bf16.msra.mxu0 0
    %129 = vmatprep.subr.bf16.mxu0 0
    %130 = vmatpush1.bf16.msra.mxu0 0
    %131 = vmatprep.subr.bf16.mxu0 0
    %132 = vmatpush1.bf16.msra.mxu0 0
    %133 = vmatprep.subr.bf16.mxu0 0
    %134 = vmatpush1.bf16.msra.mxu0 0
    %135 = vmatprep.mubr.bf16.mxu0 0
    %136 = vmatmul.mubr.bf16.gmra.mrb[0].mxu0 %v101
    %v137 = vpop.f32.mrb[0].mxu0
    %v138 = vadd.f32 0.0, %v137
    %v139 = vpop.f32.mrb[0].mxu0
    %v140 = vpop.f32.mrb[0].mxu0
    %v141 = vadd.f32 0.0, %v140
    %v142 = vpop.f32.mrb[0].mxu0
    %143 = vdwg.mxu0
    %v144 = vld [vmem:[%s4] sm:$0xf]
    %v145 = vld [vmem:[%s4 + $0x4] sm:$0xf]
    %v146 = vld [vmem:[%s4 + $0x8] sm:$0xf]
    %v147 = vld [vmem:[%s4 + $0xc] sm:$0xf]
    %v152 = vunpack.c.l.b16 %v144
    %v153 = vunpack.c.l.b16 %v145
    %v154 = vunpack.c.l.b16 %v146
    %v155 = vunpack.c.l.b16 %v147
    %v156 = vpack.c.b16 %v153, %v152
    %v157 = vpack.c.b16 %v155, %v154
    %160 = vmatprep.subr.bf16.mxu0 0
    %161 = vmatpush1.bf16.msra.mxu0 %v156
    %162 = vmatprep.subr.bf16.mxu0 0
    %163 = vmatpush1.bf16.msra.mxu0 %v157
    %164 = vmatprep.subr.bf16.mxu0 0
    %165 = vmatpush1.bf16.msra.mxu0 0
    %166 = vmatprep.subr.bf16.mxu0 0
    %167 = vmatpush1.bf16.msra.mxu0 0
    %168 = vmatprep.subr.bf16.mxu0 0
    %169 = vmatpush1.bf16.msra.mxu0 0
    %170 = vmatprep.subr.bf16.mxu0 0
    %171 = vmatpush1.bf16.msra.mxu0 0
    %172 = vmatprep.subr.bf16.mxu0 0
    %173 = vmatpush1.bf16.msra.mxu0 0
    %174 = vmatprep.subr.bf16.mxu0 0
    %175 = vmatpush1.bf16.msra.mxu0 0
    %176 = vmatprep.subr.bf16.mxu0 0
    %177 = vmatpush1.bf16.msra.mxu0 0
    %178 = vmatprep.subr.bf16.mxu0 0
    %179 = vmatpush1.bf16.msra.mxu0 0
    %180 = vmatprep.subr.bf16.mxu0 0
    %181 = vmatpush1.bf16.msra.mxu0 0
    %182 = vmatprep.subr.bf16.mxu0 0
    %183 = vmatpush1.bf16.msra.mxu0 0
    %184 = vmatprep.subr.bf16.mxu0 0
    %185 = vmatpush1.bf16.msra.mxu0 0
    %186 = vmatprep.subr.bf16.mxu0 0
    %187 = vmatpush1.bf16.msra.mxu0 0
    %188 = vmatprep.subr.bf16.mxu0 0
    %189 = vmatpush1.bf16.msra.mxu0 0
    %190 = vmatprep.subr.bf16.mxu0 0
    %191 = vmatpush1.bf16.msra.mxu0 0
    %192 = vmatprep.mubr.bf16.mxu0 0
    %193 = vmatmul.mubr.bf16.gmra.mrb[0].mxu0 %v101
    %v194 = vpop.f32.mrb[0].mxu0
    %v195 = vadd.f32 0.0, %v194
    %v196 = vpop.f32.mrb[0].mxu0
    %v197 = vpop.f32.mrb[0].mxu0
    %v198 = vadd.f32 0.0, %v197
    %v199 = vpop.f32.mrb[0].mxu0
    %200 = vdwg.mxu0
    %v201 = vld [vmem:[%s5] sm:$0xf]
    %v202 = vld [vmem:[%s5 + $0x4] sm:$0xf]
    %v203 = vld [vmem:[%s5 + $0x8] sm:$0xf]
    %v204 = vld [vmem:[%s5 + $0xc] sm:$0xf]
    %v209 = vunpack.c.l.b16 %v201
    %v210 = vunpack.c.l.b16 %v202
    %v211 = vunpack.c.l.b16 %v203
    %v212 = vunpack.c.l.b16 %v204
    %v213 = vpack.c.b16 %v210, %v209
    %v214 = vpack.c.b16 %v212, %v211
    %217 = vmatprep.subr.bf16.mxu0 0
    %218 = vmatpush1.bf16.msra.mxu0 %v213
    %219 = vmatprep.subr.bf16.mxu0 0
    %220 = vmatpush1.bf16.msra.mxu0 %v214
    %221 = vmatprep.subr.bf16.mxu0 0
    %222 = vmatpush1.bf16.msra.mxu0 0
    %223 = vmatprep.subr.bf16.mxu0 0
    %224 = vmatpush1.bf16.msra.mxu0 0
    %225 = vmatprep.subr.bf16.mxu0 0
    %226 = vmatpush1.bf16.msra.mxu0 0
    %227 = vmatprep.subr.bf16.mxu0 0
    %228 = vmatpush1.bf16.msra.mxu0 0
    %229 = vmatprep.subr.bf16.mxu0 0
    %230 = vmatpush1.bf16.msra.mxu0 0
    %231 = vmatprep.subr.bf16.mxu0 0
    %232 = vmatpush1.bf16.msra.mxu0 0
    %233 = vmatprep.subr.bf16.mxu0 0
    %234 = vmatpush1.bf16.msra.mxu0 0
    %235 = vmatprep.subr.bf16.mxu0 0
    %236 = vmatpush1.bf16.msra.mxu0 0
    %237 = vmatprep.subr.bf16.mxu0 0
    %238 = vmatpush1.bf16.msra.mxu0 0
    %239 = vmatprep.subr.bf16.mxu0 0
    %240 = vmatpush1.bf16.msra.mxu0 0
    %241 = vmatprep.subr.bf16.mxu0 0
    %242 = vmatpush1.bf16.msra.mxu0 0
    %243 = vmatprep.subr.bf16.mxu0 0
    %244 = vmatpush1.bf16.msra.mxu0 0
    %245 = vmatprep.subr.bf16.mxu0 0
    %246 = vmatpush1.bf16.msra.mxu0 0
    %247 = vmatprep.subr.bf16.mxu0 0
    %248 = vmatpush1.bf16.msra.mxu0 0
    %249 = vmatprep.mubr.bf16.mxu0 0
    %250 = vmatmul.mubr.bf16.gmra.mrb[0].mxu0 %v101
    %v251 = vpop.f32.mrb[0].mxu0
    %v252 = vadd.f32 0.0, %v251
    %v253 = vpop.f32.mrb[0].mxu0
    %v254 = vpop.f32.mrb[0].mxu0
    %v255 = vadd.f32 0.0, %v254
    %v256 = vpop.f32.mrb[0].mxu0
    %257 = vdwg.mxu0
    %260 = vrot.lane.b32.xlu0 %v138, 120
    %v261 = vpop.permute.xlu0 %260
    %262 = vrot.lane.b32.xlu0 %v141, 120
    %v263 = vpop.permute.xlu0 %262
    %266 = vrot.lane.b32.xlu0 %v138, 112
    %v267 = vpop.permute.xlu0 %266
    %268 = vrot.lane.b32.xlu0 %v141, 112
    %v269 = vpop.permute.xlu0 %268
    %272 = vrot.lane.b32.xlu0 %v138, 104
    %v273 = vpop.permute.xlu0 %272
    %274 = vrot.lane.b32.xlu0 %v141, 104
    %v275 = vpop.permute.xlu0 %274
    %280 = vrot.lane.b32.xlu0 %v195, 120
    %v281 = vpop.permute.xlu0 %280
    %282 = vrot.lane.b32.xlu0 %v198, 120
    %v283 = vpop.permute.xlu0 %282
    %286 = vrot.lane.b32.xlu0 %v195, 112
    %v287 = vpop.permute.xlu0 %286
    %288 = vrot.lane.b32.xlu0 %v198, 112
    %v289 = vpop.permute.xlu0 %288
    %292 = vrot.lane.b32.xlu0 %v195, 104
    %v293 = vpop.permute.xlu0 %292
    %294 = vrot.lane.b32.xlu0 %v198, 104
    %v295 = vpop.permute.xlu0 %294
    %300 = vrot.lane.b32.xlu0 %v252, 120
    %v301 = vpop.permute.xlu0 %300
    %302 = vrot.lane.b32.xlu0 %v255, 120
    %v303 = vpop.permute.xlu0 %302
    %306 = vrot.lane.b32.xlu0 %v252, 112
    %v307 = vpop.permute.xlu0 %306
    %308 = vrot.lane.b32.xlu0 %v255, 112
    %v309 = vpop.permute.xlu0 %308
    %312 = vrot.lane.b32.xlu0 %v252, 104
    %v313 = vpop.permute.xlu0 %312
    %314 = vrot.lane.b32.xlu0 %v255, 104
    %v315 = vpop.permute.xlu0 %314
    %v318 = vpack.c.bf16 %v255, %v252
    %v319 = vpack.c.bf16 %v303, %v301
    %v320 = vpack.c.bf16 %v309, %v307
    %v321 = vpack.c.bf16 %v315, %v313
    %v322 = vpack.c.bf16 %v141, %v138
    %v323 = vpack.c.bf16 %v263, %v261
    %v324 = vpack.c.bf16 %v269, %v267
    %v325 = vpack.c.bf16 %v275, %v273
    %v326 = vpack.c.bf16 %v198, %v195
    %v327 = vpack.c.bf16 %v283, %v281
    %v328 = vpack.c.bf16 %v289, %v287
    %v329 = vpack.c.bf16 %v295, %v293
    %vm330 = vcmask 64512
    %v332 = vsel %vm330, %v322, 0
    %v335 = vsel %vm330, %v323, 0
    %v338 = vsel %vm330, %v324, 0
    %v341 = vsel %vm330, %v325, 0
    %v344 = vsel %vm330, %v326, 0
    %v347 = vsel %vm330, %v327, 0
    %v350 = vsel %vm330, %v328, 0
    %v353 = vsel %vm330, %v329, 0
    %355 = vmatprep.subr.bf16.mxu0 0
    %356 = vmatpush1.bf16.xpose.msra.mxu0 %v344
    %357 = vmatprep.subr.bf16.mxu0 0
    %358 = vmatpush1.bf16.xpose.msra.mxu0 %v347
    %359 = vmatprep.subr.bf16.mxu0 0
    %360 = vmatpush1.bf16.xpose.msra.mxu0 %v350
    %361 = vmatprep.subr.bf16.mxu0 0
    %362 = vmatpush1.bf16.xpose.msra.mxu0 %v353
    %363 = vmatprep.subr.bf16.mxu0 0
    %364 = vmatpush1.bf16.xpose.msra.mxu0 0
    %365 = vmatprep.subr.bf16.mxu0 0
    %366 = vmatpush1.bf16.xpose.msra.mxu0 0
    %367 = vmatprep.subr.bf16.mxu0 0
    %368 = vmatpush1.bf16.xpose.msra.mxu0 0
    %369 = vmatprep.subr.bf16.mxu0 0
    %370 = vmatpush1.bf16.xpose.msra.mxu0 0
    %371 = vmatprep.subr.bf16.mxu0 0
    %372 = vmatpush1.bf16.xpose.msra.mxu0 0
    %373 = vmatprep.subr.bf16.mxu0 0
    %374 = vmatpush1.bf16.xpose.msra.mxu0 0
    %375 = vmatprep.subr.bf16.mxu0 0
    %376 = vmatpush1.bf16.xpose.msra.mxu0 0
    %377 = vmatprep.subr.bf16.mxu0 0
    %378 = vmatpush1.bf16.xpose.msra.mxu0 0
    %379 = vmatprep.subr.bf16.mxu0 0
    %380 = vmatpush1.bf16.xpose.msra.mxu0 0
    %381 = vmatprep.subr.bf16.mxu0 0
    %382 = vmatpush1.bf16.xpose.msra.mxu0 0
    %383 = vmatprep.subr.bf16.mxu0 0
    %384 = vmatpush1.bf16.xpose.msra.mxu0 0
    %385 = vmatprep.subr.bf16.mxu0 0
    %386 = vmatpush1.bf16.xpose.msra.mxu0 0
    %387 = vmatprep.mubr.bf16.mxu0 0
    %388 = vmatmul.mubr.bf16.gmra.mrb[0].mxu0 %v332
    %v389 = vpop.f32.mrb[0].mxu0
    %v390 = vadd.f32 %v48, %v389
    %v391 = vpop.f32.mrb[0].mxu0
    %v392 = vpop.f32.mrb[0].mxu0
    %v393 = vadd.f32 %v49, %v392
    %v394 = vpop.f32.mrb[0].mxu0
    %395 = vmatprep.mubr.bf16.mxu0 0
    %396 = vmatmul.mubr.bf16.gmra.mrb[0].mxu0 %v335
    %v397 = vpop.f32.mrb[0].mxu0
    %v398 = vadd.f32 %v50, %v397
    %v399 = vpop.f32.mrb[0].mxu0
    %v400 = vpop.f32.mrb[0].mxu0
    %v401 = vadd.f32 %v51, %v400
    %v402 = vpop.f32.mrb[0].mxu0
    %403 = vmatprep.mubr.bf16.mxu0 0
    %404 = vmatmul.mubr.bf16.gmra.mrb[0].mxu0 %v338
    %v405 = vpop.f32.mrb[0].mxu0
    %v406 = vadd.f32 %v52, %v405
    %v407 = vpop.f32.mrb[0].mxu0
    %v408 = vpop.f32.mrb[0].mxu0
    %v409 = vadd.f32 %v53, %v408
    %v410 = vpop.f32.mrb[0].mxu0
    %411 = vmatprep.mubr.bf16.mxu0 0
    %412 = vmatmul.mubr.bf16.gmra.mrb[0].mxu0 %v341
    %v413 = vpop.f32.mrb[0].mxu0
    %v414 = vadd.f32 %v54, %v413
    %v415 = vpop.f32.mrb[0].mxu0
    %v416 = vpop.f32.mrb[0].mxu0
    %v417 = vadd.f32 %v55, %v416
    %v418 = vpop.f32.mrb[0].mxu0
    %419 = vdwg.mxu0
    %vm420 = vcmask 523264
    %v421 = vsel %vm420, %v390, -inf
    %422 = vmax.xlane.f32.xlu0 %v421
    %v423 = vpop.xlane.xlu0 %422
    %v424 = vsel %vm420, %v393, -inf
    %425 = vmax.xlane.f32.xlu0 %v424
    %v426 = vpop.xlane.xlu0 %425
    %v427 = vsel %vm420, %v398, -inf
    %428 = vmax.xlane.f32.xlu0 %v427
    %v429 = vpop.xlane.xlu0 %428
    %v430 = vsel %vm420, %v401, -inf
    %431 = vmax.xlane.f32.xlu0 %v430
    %v432 = vpop.xlane.xlu0 %431
    %v433 = vsel %vm420, %v406, -inf
    %434 = vmax.xlane.f32.xlu0 %v433
    %v435 = vpop.xlane.xlu0 %434
    %v436 = vsel %vm420, %v409, -inf
    %437 = vmax.xlane.f32.xlu0 %v436
    %v438 = vpop.xlane.xlu0 %437
    %v439 = vsel %vm420, %v414, -inf
    %440 = vmax.xlane.f32.xlu0 %v439
    %v441 = vpop.xlane.xlu0 %440
    %v442 = vsel %vm420, %v417, -inf
    %443 = vmax.xlane.f32.xlu0 %v442
    %v444 = vpop.xlane.xlu0 %443
    %v445 = vsub.f32 %v390, %v423
    %v446 = vsub.f32 %v393, %v426
    %v447 = vsub.f32 %v398, %v429
    %v448 = vsub.f32 %v401, %v432
    %v449 = vsub.f32 %v406, %v435
    %v450 = vsub.f32 %v409, %v438
    %v451 = vsub.f32 %v414, %v441
    %v452 = vsub.f32 %v417, %v444
    %v453 = vmul.f32 %v445, 1.442695
    %v454 = vpow.pop %v453
    %v455 = vmul.f32 %v446, 1.442695
    %v456 = vpow.pop %v455
    %v457 = vmul.f32 %v447, 1.442695
    %v458 = vpow.pop %v457
    %v459 = vmul.f32 %v448, 1.442695
    %v460 = vpow.pop %v459
    %v461 = vmul.f32 %v449, 1.442695
    %v462 = vpow.pop %v461
    %v463 = vmul.f32 %v450, 1.442695
    %v464 = vpow.pop %v463
    %v465 = vmul.f32 %v451, 1.442695
    %v466 = vpow.pop %v465
    %v467 = vmul.f32 %v452, 1.442695
    %v468 = vpow.pop %v467
    %v469 = vsel %vm420, %v454, 0.0
    %470 = vadd.xlane.f32.xlu0 %v469
    %v471 = vpop.xlane.xlu0 %470
    %v472 = vsel %vm420, %v456, 0.0
    %473 = vadd.xlane.f32.xlu0 %v472
    %v474 = vpop.xlane.xlu0 %473
    %v475 = vsel %vm420, %v458, 0.0
    %476 = vadd.xlane.f32.xlu0 %v475
    %v477 = vpop.xlane.xlu0 %476
    %v478 = vsel %vm420, %v460, 0.0
    %479 = vadd.xlane.f32.xlu0 %v478
    %v480 = vpop.xlane.xlu0 %479
    %v481 = vsel %vm420, %v462, 0.0
    %482 = vadd.xlane.f32.xlu0 %v481
    %v483 = vpop.xlane.xlu0 %482
    %v484 = vsel %vm420, %v464, 0.0
    %485 = vadd.xlane.f32.xlu0 %v484
    %v486 = vpop.xlane.xlu0 %485
    %v487 = vsel %vm420, %v466, 0.0
    %488 = vadd.xlane.f32.xlu0 %v487
    %v489 = vpop.xlane.xlu0 %488
    %v490 = vsel %vm420, %v468, 0.0
    %491 = vadd.xlane.f32.xlu0 %v490
    %v492 = vpop.xlane.xlu0 %491
    %v493 = vrcp.pop %v471
    %v494 = vrcp.pop %v474
    %v495 = vrcp.pop %v477
    %v496 = vrcp.pop %v480
    %v497 = vrcp.pop %v483
    %v498 = vrcp.pop %v486
    %v499 = vrcp.pop %v489
    %v500 = vrcp.pop %v492
    %v501 = vmul.f32 %v454, %v493
    %v502 = vmul.f32 %v456, %v494
    %v503 = vmul.f32 %v458, %v495
    %v504 = vmul.f32 %v460, %v496
    %v505 = vmul.f32 %v462, %v497
    %v506 = vmul.f32 %v464, %v498
    %v507 = vmul.f32 %v466, %v499
    %v508 = vmul.f32 %v468, %v500
    %v509 = vpack.c.bf16 %v502, %v501
    %v510 = vpack.c.bf16 %v504, %v503
    %v511 = vpack.c.bf16 %v506, %v505
    %v512 = vpack.c.bf16 %v508, %v507
    %v514 = vsel %vm420, %v509, 0
    %v517 = vsel %vm420, %v510, 0
    %v520 = vsel %vm420, %v511, 0
    %v523 = vsel %vm420, %v512, 0
    %525 = vmatprep.subr.bf16.mxu0 0
    %526 = vmatpush1.bf16.msra.mxu0 %v318
    %527 = vmatprep.subr.bf16.mxu0 0
    %528 = vmatpush1.bf16.msra.mxu0 %v319
    %529 = vmatprep.subr.bf16.mxu0 0
    %530 = vmatpush1.bf16.msra.mxu0 %v320
    %531 = vmatprep.subr.bf16.mxu0 0
    %532 = vmatpush1.bf16.msra.mxu0 %v321
    %533 = vmatprep.subr.bf16.mxu0 0
    %534 = vmatpush1.bf16.msra.mxu0 0
    %535 = vmatprep.subr.bf16.mxu0 0
    %536 = vmatpush1.bf16.msra.mxu0 0
    %537 = vmatprep.subr.bf16.mxu0 0
    %538 = vmatpush1.bf16.msra.mxu0 0
    %539 = vmatprep.subr.bf16.mxu0 0
    %540 = vmatpush1.bf16.msra.mxu0 0
    %541 = vmatprep.subr.bf16.mxu0 0
    %542 = vmatpush1.bf16.msra.mxu0 0
    %543 = vmatprep.subr.bf16.mxu0 0
    %544 = vmatpush1.bf16.msra.mxu0 0
    %545 = vmatprep.subr.bf16.mxu0 0
    %546 = vmatpush1.bf16.msra.mxu0 0
    %547 = vmatprep.subr.bf16.mxu0 0
    %548 = vmatpush1.bf16.msra.mxu0 0
    %549 = vmatprep.subr.bf16.mxu0 0
    %550 = vmatpush1.bf16.msra.mxu0 0
    %551 = vmatprep.subr.bf16.mxu0 0
    %552 = vmatpush1.bf16.msra.mxu0 0
    %553 = vmatprep.subr.bf16.mxu0 0
    %554 = vmatpush1.bf16.msra.mxu0 0
    %555 = vmatprep.subr.bf16.mxu0 0
    %556 = vmatpush1.bf16.msra.mxu0 0
    %557 = vmatprep.mubr.bf16.mxu0 0
    %558 = vmatmul.mubr.bf16.gmra.mrb[0].mxu0 %v514
    %v559 = vpop.f32.mrb[0].mxu0
    %v560 = vadd.f32 0.0, %v559
    %v561 = vpop.f32.mrb[0].mxu0
    %v562 = vpop.f32.mrb[0].mxu0
    %v563 = vadd.f32 0.0, %v562
    %v564 = vpop.f32.mrb[0].mxu0
    %565 = vmatprep.mubr.bf16.mxu0 0
    %566 = vmatmul.mubr.bf16.gmra.mrb[0].mxu0 %v517
    %v567 = vpop.f32.mrb[0].mxu0
    %v568 = vadd.f32 0.0, %v567
    %v569 = vpop.f32.mrb[0].mxu0
    %v570 = vpop.f32.mrb[0].mxu0
    %v571 = vadd.f32 0.0, %v570
    %v572 = vpop.f32.mrb[0].mxu0
    %573 = vmatprep.mubr.bf16.mxu0 0
    %574 = vmatmul.mubr.bf16.gmra.mrb[0].mxu0 %v520
    %v575 = vpop.f32.mrb[0].mxu0
    %v576 = vadd.f32 0.0, %v575
    %v577 = vpop.f32.mrb[0].mxu0
    %v578 = vpop.f32.mrb[0].mxu0
    %v579 = vadd.f32 0.0, %v578
    %v580 = vpop.f32.mrb[0].mxu0
    %581 = vmatprep.mubr.bf16.mxu0 0
    %582 = vmatmul.mubr.bf16.gmra.mrb[0].mxu0 %v523
    %v583 = vpop.f32.mrb[0].mxu0
    %v584 = vadd.f32 0.0, %v583
    %v585 = vpop.f32.mrb[0].mxu0
    %v586 = vpop.f32.mrb[0].mxu0
    %v587 = vadd.f32 0.0, %v586
    %v588 = vpop.f32.mrb[0].mxu0
    %589 = vdwg.mxu0
    %592 = vrot.lane.b32.xlu0 %v568, 8
    %v593 = vpop.permute.xlu0 %592
    %594 = vrot.lane.b32.xlu0 %v571, 8
    %v595 = vpop.permute.xlu0 %594
    %600 = vrot.lane.b32.xlu0 %v576, 16
    %v601 = vpop.permute.xlu0 %600
    %602 = vrot.lane.b32.xlu0 %v579, 16
    %v603 = vpop.permute.xlu0 %602
    %608 = vrot.lane.b32.xlu0 %v584, 24
    %v609 = vpop.permute.xlu0 %608
    %610 = vrot.lane.b32.xlu0 %v587, 24
    %v611 = vpop.permute.xlu0 %610
    %v614 = vsel %vm330, %v560, %v593
    %v615 = vsel %vm330, %v563, %v595
    %vm616 = vcmask 130048
    %v617 = vsel %vm616, %v614, %v601
    %v618 = vsel %vm616, %v615, %v603
    %vm619 = vcmask 195584
    %v620 = vsel %vm619, %v617, %v609
    %v621 = vsel %vm619, %v618, %v611
    %v622 = vld [vmem:[%s6] sm:$0xf]
    %v623 = vld [vmem:[%s6 + $0x4] sm:$0xf]
    %v624 = vld [vmem:[%s6 + $0x8] sm:$0xf]
    %v625 = vld [vmem:[%s6 + $0xc] sm:$0xf]
    %v626 = vpack.c.bf16 %v621, %v620
    %v631 = vunpack.c.l.b16 %v622
    %v632 = vunpack.c.l.b16 %v623
    %v633 = vunpack.c.l.b16 %v624
    %v634 = vunpack.c.l.b16 %v625
    %v635 = vpack.c.b16 %v632, %v631
    %v636 = vpack.c.b16 %v634, %v633
    %v640 = vsel %vm59, %v626, 0
    %642 = vmatprep.subr.bf16.mxu0 0
    %643 = vmatpush1.bf16.msra.mxu0 %v635
    %644 = vmatprep.subr.bf16.mxu0 0
    %645 = vmatpush1.bf16.msra.mxu0 %v636
    %646 = vmatprep.subr.bf16.mxu0 0
    %647 = vmatpush1.bf16.msra.mxu0 0
    %648 = vmatprep.subr.bf16.mxu0 0
    %649 = vmatpush1.bf16.msra.mxu0 0
    %650 = vmatprep.subr.bf16.mxu0 0
    %651 = vmatpush1.bf16.msra.mxu0 0
    %652 = vmatprep.subr.bf16.mxu0 0
    %653 = vmatpush1.bf16.msra.mxu0 0
    %654 = vmatprep.subr.bf16.mxu0 0
    %655 = vmatpush1.bf16.msra.mxu0 0
    %656 = vmatprep.subr.bf16.mxu0 0
    %657 = vmatpush1.bf16.msra.mxu0 0
    %658 = vmatprep.subr.bf16.mxu0 0
    %659 = vmatpush1.bf16.msra.mxu0 0
    %660 = vmatprep.subr.bf16.mxu0 0
    %661 = vmatpush1.bf16.msra.mxu0 0
    %662 = vmatprep.subr.bf16.mxu0 0
    %663 = vmatpush1.bf16.msra.mxu0 0
    %664 = vmatprep.subr.bf16.mxu0 0
    %665 = vmatpush1.bf16.msra.mxu0 0
    %666 = vmatprep.subr.bf16.mxu0 0
    %667 = vmatpush1.bf16.msra.mxu0 0
    %668 = vmatprep.subr.bf16.mxu0 0
    %669 = vmatpush1.bf16.msra.mxu0 0
    %670 = vmatprep.subr.bf16.mxu0 0
    %671 = vmatpush1.bf16.msra.mxu0 0
    %672 = vmatprep.subr.bf16.mxu0 0
    %673 = vmatpush1.bf16.msra.mxu0 0
    %674 = vmatprep.mubr.bf16.mxu0 0
    %675 = vmatmul.mubr.bf16.gmra.mrb[0].mxu0 %v640
    %v676 = vpop.f32.mrb[0].mxu0
    %v677 = vadd.f32 0.0, %v676
    %v678 = vpop.f32.mrb[0].mxu0
    %v679 = vpop.f32.mrb[0].mxu0
    %v680 = vadd.f32 0.0, %v679
    %v681 = vpop.f32.mrb[0].mxu0
    %682 = vdwg.mxu0
    %v683 = vadd.f32 %v46, %v677
    %v684 = vadd.f32 %v47, %v680
    %v685 = vld [vmem:[%s7] sm:$0x1]
    %v686 = vmul.f32 %v683, %v683
    %v687 = vmul.f32 %v684, %v684
    %v688 = vsel %vm59, %v686, 0.0
    %689 = vadd.xlane.f32.xlu0 %v688
    %v690 = vpop.xlane.xlu0 %689
    %v691 = vsel %vm59, %v687, 0.0
    %692 = vadd.xlane.f32.xlu0 %v691
    %v693 = vpop.xlane.xlu0 %692
    %v694 = vmul.f32 %v690, %v66
    %v695 = vmul.f32 %v693, %v66
    %v696 = vadd.f32 %v694, 1e-06
    %v697 = vadd.f32 %v695, 1e-06
    %v698 = vrsqrt.pop %v696
    %v699 = vrsqrt.pop %v697
    %v700 = vmul.f32 %v683, %v698
    %v701 = vmul.f32 %v684, %v699
    %v703 = vlaneseq
    %v704 = vshrl.u32 %v703, 7
    %v705 = vsub.s32 0, %v704
    %v706 = vrot.slane %v685, %v705
    %v708 = vmul.f32 %v700, %v706
    %v709 = vmul.f32 %v701, %v706
    %v710 = vld [vmem:[%s8] sm:$0xf]
    %v711 = vld [vmem:[%s8 + $0x4] sm:$0xf]
    %v712 = vld [vmem:[%s8 + $0x8] sm:$0xf]
    %v713 = vld [vmem:[%s8 + $0xc] sm:$0xf]
    %v714 = vpack.c.bf16 %v709, %v708
    %v719 = vunpack.c.l.b16 %v710
    %v720 = vunpack.c.l.b16 %v711
    %v721 = vunpack.c.l.b16 %v712
    %v722 = vunpack.c.l.b16 %v713
    %v723 = vpack.c.b16 %v720, %v719
    %v724 = vpack.c.b16 %v722, %v721
    %v728 = vsel %vm59, %v714, 0
    %730 = vmatprep.subr.bf16.mxu0 0
    %731 = vmatpush1.bf16.msra.mxu0 %v723
    %732 = vmatprep.subr.bf16.mxu0 0
    %733 = vmatpush1.bf16.msra.mxu0 %v724
    %734 = vmatprep.subr.bf16.mxu0 0
    %735 = vmatpush1.bf16.msra.mxu0 0
    %736 = vmatprep.subr.bf16.mxu0 0
    %737 = vmatpush1.bf16.msra.mxu0 0
    %738 = vmatprep.subr.bf16.mxu0 0
    %739 = vmatpush1.bf16.msra.mxu0 0
    %740 = vmatprep.subr.bf16.mxu0 0
    %741 = vmatpush1.bf16.msra.mxu0 0
    %742 = vmatprep.subr.bf16.mxu0 0
    %743 = vmatpush1.bf16.msra.mxu0 0
    %744 = vmatprep.subr.bf16.mxu0 0
    %745 = vmatpush1.bf16.msra.mxu0 0
    %746 = vmatprep.subr.bf16.mxu0 0
    %747 = vmatpush1.bf16.msra.mxu0 0
    %748 = vmatprep.subr.bf16.mxu0 0
    %749 = vmatpush1.bf16.msra.mxu0 0
    %750 = vmatprep.subr.bf16.mxu0 0
    %751 = vmatpush1.bf16.msra.mxu0 0
    %752 = vmatprep.subr.bf16.mxu0 0
    %753 = vmatpush1.bf16.msra.mxu0 0
    %754 = vmatprep.subr.bf16.mxu0 0
    %755 = vmatpush1.bf16.msra.mxu0 0
    %756 = vmatprep.subr.bf16.mxu0 0
    %757 = vmatpush1.bf16.msra.mxu0 0
    %758 = vmatprep.subr.bf16.mxu0 0
    %759 = vmatpush1.bf16.msra.mxu0 0
    %760 = vmatprep.subr.bf16.mxu0 0
    %761 = vmatpush1.bf16.msra.mxu0 0
    %762 = vmatprep.mubr.bf16.mxu0 0
    %763 = vmatmul.mubr.bf16.gmra.mrb[0].mxu0 %v728
    %v764 = vpop.f32.mrb[0].mxu0
    %v765 = vadd.f32 0.0, %v764
    %v766 = vpop.f32.mrb[0].mxu0
    %v767 = vpop.f32.mrb[0].mxu0
    %v768 = vadd.f32 0.0, %v767
    %v769 = vpop.f32.mrb[0].mxu0
    %770 = vdwg.mxu0
    %v771 = vmax.f32 %v765, 0.0
    %v772 = vmax.f32 %v768, 0.0
    %v773 = vld [vmem:[%s9] sm:$0xf]
    %v774 = vld [vmem:[%s9 + $0x4] sm:$0xf]
    %v775 = vld [vmem:[%s9 + $0x8] sm:$0xf]
    %v776 = vld [vmem:[%s9 + $0xc] sm:$0xf]
    %v777 = vld [vmem:[%s9 + $0x10] sm:$0xf]
    %v778 = vld [vmem:[%s9 + $0x14] sm:$0xf]
    %v779 = vld [vmem:[%s9 + $0x18] sm:$0xf]
    %v780 = vld [vmem:[%s9 + $0x1c] sm:$0xf]
    %v781 = vpack.c.bf16 %v772, %v771
    %v790 = vunpack.c.l.b16 %v773
    %v791 = vunpack.c.l.b16 %v774
    %v792 = vunpack.c.l.b16 %v775
    %v793 = vunpack.c.l.b16 %v776
    %v794 = vunpack.c.l.b16 %v777
    %v795 = vunpack.c.l.b16 %v778
    %v796 = vunpack.c.l.b16 %v779
    %v797 = vunpack.c.l.b16 %v780
    %v798 = vpack.c.b16 %v791, %v790
    %v799 = vpack.c.b16 %v793, %v792
    %v800 = vpack.c.b16 %v795, %v794
    %v801 = vpack.c.b16 %v797, %v796
    %v807 = vsel %vm420, %v781, 0
    %809 = vmatprep.subr.bf16.mxu0 0
    %810 = vmatpush1.bf16.msra.mxu0 %v798
    %811 = vmatprep.subr.bf16.mxu0 0
    %812 = vmatpush1.bf16.msra.mxu0 %v799
    %813 = vmatprep.subr.bf16.mxu0 0
    %814 = vmatpush1.bf16.msra.mxu0 %v800
    %815 = vmatprep.subr.bf16.mxu0 0
    %816 = vmatpush1.bf16.msra.mxu0 %v801
    %817 = vmatprep.subr.bf16.mxu0 0
    %818 = vmatpush1.bf16.msra.mxu0 0
    %819 = vmatprep.subr.bf16.mxu0 0
    %820 = vmatpush1.bf16.msra.mxu0 0
    %821 = vmatprep.subr.bf16.mxu0 0
    %822 = vmatpush1.bf16.msra.mxu0 0
    %823 = vmatprep.subr.bf16.mxu0 0
    %824 = vmatpush1.bf16.msra.mxu0 0
    %825 = vmatprep.subr.bf16.mxu0 0
    %826 = vmatpush1.bf16.msra.mxu0 0
    %827 = vmatprep.subr.bf16.mxu0 0
    %828 = vmatpush1.bf16.msra.mxu0 0
    %829 = vmatprep.subr.bf16.mxu0 0
    %830 = vmatpush1.bf16.msra.mxu0 0
    %831 = vmatprep.subr.bf16.mxu0 0
    %832 = vmatpush1.bf16.msra.mxu0 0
    %833 = vmatprep.subr.bf16.mxu0 0
    %834 = vmatpush1.bf16.msra.mxu0 0
    %835 = vmatprep.subr.bf16.mxu0 0
    %836 = vmatpush1.bf16.msra.mxu0 0
    %837 = vmatprep.subr.bf16.mxu0 0
    %838 = vmatpush1.bf16.msra.mxu0 0
    %839 = vmatprep.subr.bf16.mxu0 0
    %840 = vmatpush1.bf16.msra.mxu0 0
    %841 = vmatprep.mubr.bf16.mxu0 0
    %842 = vmatmul.mubr.bf16.gmra.mrb[0].mxu0 %v807
    %v843 = vpop.f32.mrb[0].mxu0
    %v844 = vadd.f32 0.0, %v843
    %v845 = vpop.f32.mrb[0].mxu0
    %v846 = vpop.f32.mrb[0].mxu0
    %v847 = vadd.f32 0.0, %v846
    %v848 = vpop.f32.mrb[0].mxu0
    %849 = vdwg.mxu0
    %v850 = vadd.f32 %v683, %v844
    %v851 = vadd.f32 %v684, %v847
    %s852 = scalar_lea.vmem %s2, 1
    %v853 = vld [vmem:[%s852] sm:$0x1]
    %v854 = vmul.f32 %v850, %v850
    %v855 = vmul.f32 %v851, %v851
    %v856 = vsel %vm59, %v854, 0.0
    %857 = vadd.xlane.f32.xlu0 %v856
    %v858 = vpop.xlane.xlu0 %857
    %v859 = vsel %vm59, %v855, 0.0
    %860 = vadd.xlane.f32.xlu0 %v859
    %v861 = vpop.xlane.xlu0 %860
    %v862 = vmul.f32 %v858, %v66
    %v863 = vmul.f32 %v861, %v66
    %v864 = vadd.f32 %v862, 1e-06
    %v865 = vadd.f32 %v863, 1e-06
    %v866 = vrsqrt.pop %v864
    %v867 = vrsqrt.pop %v865
    %v868 = vmul.f32 %v850, %v866
    %v869 = vmul.f32 %v851, %v867
    %v871 = vlaneseq
    %v872 = vshrl.u32 %v871, 7
    %v873 = vsub.s32 0, %v872
    %v874 = vrot.slane %v853, %v873
    %v876 = vmul.f32 %v868, %v874
    %v877 = vmul.f32 %v869, %v874
    %s878 = scalar_lea.vmem %s3, 16
    %v879 = vld [vmem:[%s878] sm:$0xf]
    %v880 = vld [vmem:[%s878 + $0x4] sm:$0xf]
    %v881 = vld [vmem:[%s878 + $0x8] sm:$0xf]
    %v882 = vld [vmem:[%s878 + $0xc] sm:$0xf]
    %v883 = vpack.c.bf16 %v877, %v876
    %v888 = vunpack.c.l.b16 %v879
    %v889 = vunpack.c.l.b16 %v880
    %v890 = vunpack.c.l.b16 %v881
    %v891 = vunpack.c.l.b16 %v882
    %v892 = vpack.c.b16 %v889, %v888
    %v893 = vpack.c.b16 %v891, %v890
    %v897 = vsel %vm59, %v883, 0
    %899 = vmatprep.subr.bf16.mxu0 0
    %900 = vmatpush1.bf16.msra.mxu0 %v892
    %901 = vmatprep.subr.bf16.mxu0 0
    %902 = vmatpush1.bf16.msra.mxu0 %v893
    %903 = vmatprep.subr.bf16.mxu0 0
    %904 = vmatpush1.bf16.msra.mxu0 0
    %905 = vmatprep.subr.bf16.mxu0 0
    %906 = vmatpush1.bf16.msra.mxu0 0
    %907 = vmatprep.subr.bf16.mxu0 0
    %908 = vmatpush1.bf16.msra.mxu0 0
    %909 = vmatprep.subr.bf16.mxu0 0
    %910 = vmatpush1.bf16.msra.mxu0 0
    %911 = vmatprep.subr.bf16.mxu0 0
    %912 = vmatpush1.bf16.msra.mxu0 0
    %913 = vmatprep.subr.bf16.mxu0 0
    %914 = vmatpush1.bf16.msra.mxu0 0
    %915 = vmatprep.subr.bf16.mxu0 0
    %916 = vmatpush1.bf16.msra.mxu0 0
    %917 = vmatprep.subr.bf16.mxu0 0
    %918 = vmatpush1.bf16.msra.mxu0 0
    %919 = vmatprep.subr.bf16.mxu0 0
    %920 = vmatpush1.bf16.msra.mxu0 0
    %921 = vmatprep.subr.bf16.mxu0 0
    %922 = vmatpush1.bf16.msra.mxu0 0
    %923 = vmatprep.subr.bf16.mxu0 0
    %924 = vmatpush1.bf16.msra.mxu0 0
    %925 = vmatprep.subr.bf16.mxu0 0
    %926 = vmatpush1.bf16.msra.mxu0 0
    %927 = vmatprep.subr.bf16.mxu0 0
    %928 = vmatpush1.bf16.msra.mxu0 0
    %929 = vmatprep.subr.bf16.mxu0 0
    %930 = vmatpush1.bf16.msra.mxu0 0
    %931 = vmatprep.mubr.bf16.mxu0 0
    %932 = vmatmul.mubr.bf16.gmra.mrb[0].mxu0 %v897
    %v933 = vpop.f32.mrb[0].mxu0
    %v934 = vadd.f32 0.0, %v933
    %v935 = vpop.f32.mrb[0].mxu0
    %v936 = vpop.f32.mrb[0].mxu0
    %v937 = vadd.f32 0.0, %v936
    %v938 = vpop.f32.mrb[0].mxu0
    %939 = vdwg.mxu0
    %s940 = scalar_lea.vmem %s4, 16
    %v941 = vld [vmem:[%s940] sm:$0xf]
    %v942 = vld [vmem:[%s940 + $0x4] sm:$0xf]
    %v943 = vld [vmem:[%s940 + $0x8] sm:$0xf]
    %v944 = vld [vmem:[%s940 + $0xc] sm:$0xf]
    %v949 = vunpack.c.l.b16 %v941
    %v950 = vunpack.c.l.b16 %v942
    %v951 = vunpack.c.l.b16 %v943
    %v952 = vunpack.c.l.b16 %v944
    %v953 = vpack.c.b16 %v950, %v949
    %v954 = vpack.c.b16 %v952, %v951
    %957 = vmatprep.subr.bf16.mxu0 0
    %958 = vmatpush1.bf16.msra.mxu0 %v953
    %959 = vmatprep.subr.bf16.mxu0 0
    %960 = vmatpush1.bf16.msra.mxu0 %v954
    %961 = vmatprep.subr.bf16.mxu0 0
    %962 = vmatpush1.bf16.msra.mxu0 0
    %963 = vmatprep.subr.bf16.mxu0 0
    %964 = vmatpush1.bf16.msra.mxu0 0
    %965 = vmatprep.subr.bf16.mxu0 0
    %966 = vmatpush1.bf16.msra.mxu0 0
    %967 = vmatprep.subr.bf16.mxu0 0
    %968 = vmatpush1.bf16.msra.mxu0 0
    %969 = vmatprep.subr.bf16.mxu0 0
    %970 = vmatpush1.bf16.msra.mxu0 0
    %971 = vmatprep.subr.bf16.mxu0 0
    %972 = vmatpush1.bf16.msra.mxu0 0
    %973 = vmatprep.subr.bf16.mxu0 0
    %974 = vmatpush1.bf16.msra.mxu0 0
    %975 = vmatprep.subr.bf16.mxu0 0
    %976 = vmatpush1.bf16.msra.mxu0 0
    %977 = vmatprep.subr.bf16.mxu0 0
    %978 = vmatpush1.bf16.msra.mxu0 0
    %979 = vmatprep.subr.bf16.mxu0 0
    %980 = vmatpush1.bf16.msra.mxu0 0
    %981 = vmatprep.subr.bf16.mxu0 0
    %982 = vmatpush1.bf16.msra.mxu0 0
    %983 = vmatprep.subr.bf16.mxu0 0
    %984 = vmatpush1.bf16.msra.mxu0 0
    %985 = vmatprep.subr.bf16.mxu0 0
    %986 = vmatpush1.bf16.msra.mxu0 0
    %987 = vmatprep.subr.bf16.mxu0 0
    %988 = vmatpush1.bf16.msra.mxu0 0
    %989 = vmatprep.mubr.bf16.mxu0 0
    %990 = vmatmul.mubr.bf16.gmra.mrb[0].mxu0 %v897
    %v991 = vpop.f32.mrb[0].mxu0
    %v992 = vadd.f32 0.0, %v991
    %v993 = vpop.f32.mrb[0].mxu0
    %v994 = vpop.f32.mrb[0].mxu0
    %v995 = vadd.f32 0.0, %v994
    %v996 = vpop.f32.mrb[0].mxu0
    %997 = vdwg.mxu0
    %s998 = scalar_lea.vmem %s5, 16
    %v999 = vld [vmem:[%s998] sm:$0xf]
    %v1000 = vld [vmem:[%s998 + $0x4] sm:$0xf]
    %v1001 = vld [vmem:[%s998 + $0x8] sm:$0xf]
    %v1002 = vld [vmem:[%s998 + $0xc] sm:$0xf]
    %v1007 = vunpack.c.l.b16 %v999
    %v1008 = vunpack.c.l.b16 %v1000
    %v1009 = vunpack.c.l.b16 %v1001
    %v1010 = vunpack.c.l.b16 %v1002
    %v1011 = vpack.c.b16 %v1008, %v1007
    %v1012 = vpack.c.b16 %v1010, %v1009
    %1015 = vmatprep.subr.bf16.mxu0 0
    %1016 = vmatpush1.bf16.msra.mxu0 %v1011
    %1017 = vmatprep.subr.bf16.mxu0 0
    %1018 = vmatpush1.bf16.msra.mxu0 %v1012
    %1019 = vmatprep.subr.bf16.mxu0 0
    %1020 = vmatpush1.bf16.msra.mxu0 0
    %1021 = vmatprep.subr.bf16.mxu0 0
    %1022 = vmatpush1.bf16.msra.mxu0 0
    %1023 = vmatprep.subr.bf16.mxu0 0
    %1024 = vmatpush1.bf16.msra.mxu0 0
    %1025 = vmatprep.subr.bf16.mxu0 0
    %1026 = vmatpush1.bf16.msra.mxu0 0
    %1027 = vmatprep.subr.bf16.mxu0 0
    %1028 = vmatpush1.bf16.msra.mxu0 0
    %1029 = vmatprep.subr.bf16.mxu0 0
    %1030 = vmatpush1.bf16.msra.mxu0 0
    %1031 = vmatprep.subr.bf16.mxu0 0
    %1032 = vmatpush1.bf16.msra.mxu0 0
    %1033 = vmatprep.subr.bf16.mxu0 0
    %1034 = vmatpush1.bf16.msra.mxu0 0
    %1035 = vmatprep.subr.bf16.mxu0 0
    %1036 = vmatpush1.bf16.msra.mxu0 0
    %1037 = vmatprep.subr.bf16.mxu0 0
    %1038 = vmatpush1.bf16.msra.mxu0 0
    %1039 = vmatprep.subr.bf16.mxu0 0
    %1040 = vmatpush1.bf16.msra.mxu0 0
    %1041 = vmatprep.subr.bf16.mxu0 0
    %1042 = vmatpush1.bf16.msra.mxu0 0
    %1043 = vmatprep.subr.bf16.mxu0 0
    %1044 = vmatpush1.bf16.msra.mxu0 0
    %1045 = vmatprep.subr.bf16.mxu0 0
    %1046 = vmatpush1.bf16.msra.mxu0 0
    %1047 = vmatprep.mubr.bf16.mxu0 0
    %1048 = vmatmul.mubr.bf16.gmra.mrb[0].mxu0 %v897
    %v1049 = vpop.f32.mrb[0].mxu0
    %v1050 = vadd.f32 0.0, %v1049
    %v1051 = vpop.f32.mrb[0].mxu0
    %v1052 = vpop.f32.mrb[0].mxu0
    %v1053 = vadd.f32 0.0, %v1052
    %v1054 = vpop.f32.mrb[0].mxu0
    %1055 = vdwg.mxu0
    %1058 = vrot.lane.b32.xlu0 %v934, 120
    %v1059 = vpop.permute.xlu0 %1058
    %1060 = vrot.lane.b32.xlu0 %v937, 120
    %v1061 = vpop.permute.xlu0 %1060
    %1064 = vrot.lane.b32.xlu0 %v934, 112
    %v1065 = vpop.permute.xlu0 %1064
    %1066 = vrot.lane.b32.xlu0 %v937, 112
    %v1067 = vpop.permute.xlu0 %1066
    %1070 = vrot.lane.b32.xlu0 %v934, 104
    %v1071 = vpop.permute.xlu0 %1070
    %1072 = vrot.lane.b32.xlu0 %v937, 104
    %v1073 = vpop.permute.xlu0 %1072
    %1078 = vrot.lane.b32.xlu0 %v992, 120
    %v1079 = vpop.permute.xlu0 %1078
    %1080 = vrot.lane.b32.xlu0 %v995, 120
    %v1081 = vpop.permute.xlu0 %1080
    %1084 = vrot.lane.b32.xlu0 %v992, 112
    %v1085 = vpop.permute.xlu0 %1084
    %1086 = vrot.lane.b32.xlu0 %v995, 112
    %v1087 = vpop.permute.xlu0 %1086
    %1090 = vrot.lane.b32.xlu0 %v992, 104
    %v1091 = vpop.permute.xlu0 %1090
    %1092 = vrot.lane.b32.xlu0 %v995, 104
    %v1093 = vpop.permute.xlu0 %1092
    %1098 = vrot.lane.b32.xlu0 %v1050, 120
    %v1099 = vpop.permute.xlu0 %1098
    %1100 = vrot.lane.b32.xlu0 %v1053, 120
    %v1101 = vpop.permute.xlu0 %1100
    %1104 = vrot.lane.b32.xlu0 %v1050, 112
    %v1105 = vpop.permute.xlu0 %1104
    %1106 = vrot.lane.b32.xlu0 %v1053, 112
    %v1107 = vpop.permute.xlu0 %1106
    %1110 = vrot.lane.b32.xlu0 %v1050, 104
    %v1111 = vpop.permute.xlu0 %1110
    %1112 = vrot.lane.b32.xlu0 %v1053, 104
    %v1113 = vpop.permute.xlu0 %1112
    %v1116 = vpack.c.bf16 %v1053, %v1050
    %v1117 = vpack.c.bf16 %v1101, %v1099
    %v1118 = vpack.c.bf16 %v1107, %v1105
    %v1119 = vpack.c.bf16 %v1113, %v1111
    %v1120 = vpack.c.bf16 %v937, %v934
    %v1121 = vpack.c.bf16 %v1061, %v1059
    %v1122 = vpack.c.bf16 %v1067, %v1065
    %v1123 = vpack.c.bf16 %v1073, %v1071
    %v1124 = vpack.c.bf16 %v995, %v992
    %v1125 = vpack.c.bf16 %v1081, %v1079
    %v1126 = vpack.c.bf16 %v1087, %v1085
    %v1127 = vpack.c.bf16 %v1093, %v1091
    %v1129 = vsel %vm330, %v1120, 0
    %v1132 = vsel %vm330, %v1121, 0
    %v1135 = vsel %vm330, %v1122, 0
    %v1138 = vsel %vm330, %v1123, 0
    %v1141 = vsel %vm330, %v1124, 0
    %v1144 = vsel %vm330, %v1125, 0
    %v1147 = vsel %vm330, %v1126, 0
    %v1150 = vsel %vm330, %v1127, 0
    %1152 = vmatprep.subr.bf16.mxu0 0
    %1153 = vmatpush1.bf16.xpose.msra.mxu0 %v1141
    %1154 = vmatprep.subr.bf16.mxu0 0
    %1155 = vmatpush1.bf16.xpose.msra.mxu0 %v1144
    %1156 = vmatprep.subr.bf16.mxu0 0
    %1157 = vmatpush1.bf16.xpose.msra.mxu0 %v1147
    %1158 = vmatprep.subr.bf16.mxu0 0
    %1159 = vmatpush1.bf16.xpose.msra.mxu0 %v1150
    %1160 = vmatprep.subr.bf16.mxu0 0
    %1161 = vmatpush1.bf16.xpose.msra.mxu0 0
    %1162 = vmatprep.subr.bf16.mxu0 0
    %1163 = vmatpush1.bf16.xpose.msra.mxu0 0
    %1164 = vmatprep.subr.bf16.mxu0 0
    %1165 = vmatpush1.bf16.xpose.msra.mxu0 0
    %1166 = vmatprep.subr.bf16.mxu0 0
    %1167 = vmatpush1.bf16.xpose.msra.mxu0 0
    %1168 = vmatprep.subr.bf16.mxu0 0
    %1169 = vmatpush1.bf16.xpose.msra.mxu0 0
    %1170 = vmatprep.subr.bf16.mxu0 0
    %1171 = vmatpush1.bf16.xpose.msra.mxu0 0
    %1172 = vmatprep.subr.bf16.mxu0 0
    %1173 = vmatpush1.bf16.xpose.msra.mxu0 0
    %1174 = vmatprep.subr.bf16.mxu0 0
    %1175 = vmatpush1.bf16.xpose.msra.mxu0 0
    %1176 = vmatprep.subr.bf16.mxu0 0
    %1177 = vmatpush1.bf16.xpose.msra.mxu0 0
    %1178 = vmatprep.subr.bf16.mxu0 0
    %1179 = vmatpush1.bf16.xpose.msra.mxu0 0
    %1180 = vmatprep.subr.bf16.mxu0 0
    %1181 = vmatpush1.bf16.xpose.msra.mxu0 0
    %1182 = vmatprep.subr.bf16.mxu0 0
    %1183 = vmatpush1.bf16.xpose.msra.mxu0 0
    %1184 = vmatprep.mubr.bf16.mxu0 0
    %1185 = vmatmul.mubr.bf16.gmra.mrb[0].mxu0 %v1129
    %v1186 = vpop.f32.mrb[0].mxu0
    %v1187 = vadd.f32 %v48, %v1186
    %v1188 = vpop.f32.mrb[0].mxu0
    %v1189 = vpop.f32.mrb[0].mxu0
    %v1190 = vadd.f32 %v49, %v1189
    %v1191 = vpop.f32.mrb[0].mxu0
    %1192 = vmatprep.mubr.bf16.mxu0 0
    %1193 = vmatmul.mubr.bf16.gmra.mrb[0].mxu0 %v1132
    %v1194 = vpop.f32.mrb[0].mxu0
    %v1195 = vadd.f32 %v50, %v1194
    %v1196 = vpop.f32.mrb[0].mxu0
    %v1197 = vpop.f32.mrb[0].mxu0
    %v1198 = vadd.f32 %v51, %v1197
    %v1199 = vpop.f32.mrb[0].mxu0
    %1200 = vmatprep.mubr.bf16.mxu0 0
    %1201 = vmatmul.mubr.bf16.gmra.mrb[0].mxu0 %v1135
    %v1202 = vpop.f32.mrb[0].mxu0
    %v1203 = vadd.f32 %v52, %v1202
    %v1204 = vpop.f32.mrb[0].mxu0
    %v1205 = vpop.f32.mrb[0].mxu0
    %v1206 = vadd.f32 %v53, %v1205
    %v1207 = vpop.f32.mrb[0].mxu0
    %1208 = vmatprep.mubr.bf16.mxu0 0
    %1209 = vmatmul.mubr.bf16.gmra.mrb[0].mxu0 %v1138
    %v1210 = vpop.f32.mrb[0].mxu0
    %v1211 = vadd.f32 %v54, %v1210
    %v1212 = vpop.f32.mrb[0].mxu0
    %v1213 = vpop.f32.mrb[0].mxu0
    %v1214 = vadd.f32 %v55, %v1213
    %v1215 = vpop.f32.mrb[0].mxu0
    %1216 = vdwg.mxu0
    %v1217 = vsel %vm420, %v1187, -inf
    %1218 = vmax.xlane.f32.xlu0 %v1217
    %v1219 = vpop.xlane.xlu0 %1218
    %v1220 = vsel %vm420, %v1190, -inf
    %1221 = vmax.xlane.f32.xlu0 %v1220
    %v1222 = vpop.xlane.xlu0 %1221
    %v1223 = vsel %vm420, %v1195, -inf
    %1224 = vmax.xlane.f32.xlu0 %v1223
    %v1225 = vpop.xlane.xlu0 %1224
    %v1226 = vsel %vm420, %v1198, -inf
    %1227 = vmax.xlane.f32.xlu0 %v1226
    %v1228 = vpop.xlane.xlu0 %1227
    %v1229 = vsel %vm420, %v1203, -inf
    %1230 = vmax.xlane.f32.xlu0 %v1229
    %v1231 = vpop.xlane.xlu0 %1230
    %v1232 = vsel %vm420, %v1206, -inf
    %1233 = vmax.xlane.f32.xlu0 %v1232
    %v1234 = vpop.xlane.xlu0 %1233
    %v1235 = vsel %vm420, %v1211, -inf
    %1236 = vmax.xlane.f32.xlu0 %v1235
    %v1237 = vpop.xlane.xlu0 %1236
    %v1238 = vsel %vm420, %v1214, -inf
    %1239 = vmax.xlane.f32.xlu0 %v1238
    %v1240 = vpop.xlane.xlu0 %1239
    %v1241 = vsub.f32 %v1187, %v1219
    %v1242 = vsub.f32 %v1190, %v1222
    %v1243 = vsub.f32 %v1195, %v1225
    %v1244 = vsub.f32 %v1198, %v1228
    %v1245 = vsub.f32 %v1203, %v1231
    %v1246 = vsub.f32 %v1206, %v1234
    %v1247 = vsub.f32 %v1211, %v1237
    %v1248 = vsub.f32 %v1214, %v1240
    %v1249 = vmul.f32 %v1241, 1.442695
    %v1250 = vpow.pop %v1249
    %v1251 = vmul.f32 %v1242, 1.442695
    %v1252 = vpow.pop %v1251
    %v1253 = vmul.f32 %v1243, 1.442695
    %v1254 = vpow.pop %v1253
    %v1255 = vmul.f32 %v1244, 1.442695
    %v1256 = vpow.pop %v1255
    %v1257 = vmul.f32 %v1245, 1.442695
    %v1258 = vpow.pop %v1257
    %v1259 = vmul.f32 %v1246, 1.442695
    %v1260 = vpow.pop %v1259
    %v1261 = vmul.f32 %v1247, 1.442695
    %v1262 = vpow.pop %v1261
    %v1263 = vmul.f32 %v1248, 1.442695
    %v1264 = vpow.pop %v1263
    %v1265 = vsel %vm420, %v1250, 0.0
    %1266 = vadd.xlane.f32.xlu0 %v1265
    %v1267 = vpop.xlane.xlu0 %1266
    %v1268 = vsel %vm420, %v1252, 0.0
    %1269 = vadd.xlane.f32.xlu0 %v1268
    %v1270 = vpop.xlane.xlu0 %1269
    %v1271 = vsel %vm420, %v1254, 0.0
    %1272 = vadd.xlane.f32.xlu0 %v1271
    %v1273 = vpop.xlane.xlu0 %1272
    %v1274 = vsel %vm420, %v1256, 0.0
    %1275 = vadd.xlane.f32.xlu0 %v1274
    %v1276 = vpop.xlane.xlu0 %1275
    %v1277 = vsel %vm420, %v1258, 0.0
    %1278 = vadd.xlane.f32.xlu0 %v1277
    %v1279 = vpop.xlane.xlu0 %1278
    %v1280 = vsel %vm420, %v1260, 0.0
    %1281 = vadd.xlane.f32.xlu0 %v1280
    %v1282 = vpop.xlane.xlu0 %1281
    %v1283 = vsel %vm420, %v1262, 0.0
    %1284 = vadd.xlane.f32.xlu0 %v1283
    %v1285 = vpop.xlane.xlu0 %1284
    %v1286 = vsel %vm420, %v1264, 0.0
    %1287 = vadd.xlane.f32.xlu0 %v1286
    %v1288 = vpop.xlane.xlu0 %1287
    %v1289 = vrcp.pop %v1267
    %v1290 = vrcp.pop %v1270
    %v1291 = vrcp.pop %v1273
    %v1292 = vrcp.pop %v1276
    %v1293 = vrcp.pop %v1279
    %v1294 = vrcp.pop %v1282
    %v1295 = vrcp.pop %v1285
    %v1296 = vrcp.pop %v1288
    %v1297 = vmul.f32 %v1250, %v1289
    %v1298 = vmul.f32 %v1252, %v1290
    %v1299 = vmul.f32 %v1254, %v1291
    %v1300 = vmul.f32 %v1256, %v1292
    %v1301 = vmul.f32 %v1258, %v1293
    %v1302 = vmul.f32 %v1260, %v1294
    %v1303 = vmul.f32 %v1262, %v1295
    %v1304 = vmul.f32 %v1264, %v1296
    %v1305 = vpack.c.bf16 %v1298, %v1297
    %v1306 = vpack.c.bf16 %v1300, %v1299
    %v1307 = vpack.c.bf16 %v1302, %v1301
    %v1308 = vpack.c.bf16 %v1304, %v1303
    %v1310 = vsel %vm420, %v1305, 0
    %v1313 = vsel %vm420, %v1306, 0
    %v1316 = vsel %vm420, %v1307, 0
    %v1319 = vsel %vm420, %v1308, 0
    %1321 = vmatprep.subr.bf16.mxu0 0
    %1322 = vmatpush1.bf16.msra.mxu0 %v1116
    %1323 = vmatprep.subr.bf16.mxu0 0
    %1324 = vmatpush1.bf16.msra.mxu0 %v1117
    %1325 = vmatprep.subr.bf16.mxu0 0
    %1326 = vmatpush1.bf16.msra.mxu0 %v1118
    %1327 = vmatprep.subr.bf16.mxu0 0
    %1328 = vmatpush1.bf16.msra.mxu0 %v1119
    %1329 = vmatprep.subr.bf16.mxu0 0
    %1330 = vmatpush1.bf16.msra.mxu0 0
    %1331 = vmatprep.subr.bf16.mxu0 0
    %1332 = vmatpush1.bf16.msra.mxu0 0
    %1333 = vmatprep.subr.bf16.mxu0 0
    %1334 = vmatpush1.bf16.msra.mxu0 0
    %1335 = vmatprep.subr.bf16.mxu0 0
    %1336 = vmatpush1.bf16.msra.mxu0 0
    %1337 = vmatprep.subr.bf16.mxu0 0
    %1338 = vmatpush1.bf16.msra.mxu0 0
    %1339 = vmatprep.subr.bf16.mxu0 0
    %1340 = vmatpush1.bf16.msra.mxu0 0
    %1341 = vmatprep.subr.bf16.mxu0 0
    %1342 = vmatpush1.bf16.msra.mxu0 0
    %1343 = vmatprep.subr.bf16.mxu0 0
    %1344 = vmatpush1.bf16.msra.mxu0 0
    %1345 = vmatprep.subr.bf16.mxu0 0
    %1346 = vmatpush1.bf16.msra.mxu0 0
    %1347 = vmatprep.subr.bf16.mxu0 0
    %1348 = vmatpush1.bf16.msra.mxu0 0
    %1349 = vmatprep.subr.bf16.mxu0 0
    %1350 = vmatpush1.bf16.msra.mxu0 0
    %1351 = vmatprep.subr.bf16.mxu0 0
    %1352 = vmatpush1.bf16.msra.mxu0 0
    %1353 = vmatprep.mubr.bf16.mxu0 0
    %1354 = vmatmul.mubr.bf16.gmra.mrb[0].mxu0 %v1310
    %v1355 = vpop.f32.mrb[0].mxu0
    %v1356 = vadd.f32 0.0, %v1355
    %v1357 = vpop.f32.mrb[0].mxu0
    %v1358 = vpop.f32.mrb[0].mxu0
    %v1359 = vadd.f32 0.0, %v1358
    %v1360 = vpop.f32.mrb[0].mxu0
    %1361 = vmatprep.mubr.bf16.mxu0 0
    %1362 = vmatmul.mubr.bf16.gmra.mrb[0].mxu0 %v1313
    %v1363 = vpop.f32.mrb[0].mxu0
    %v1364 = vadd.f32 0.0, %v1363
    %v1365 = vpop.f32.mrb[0].mxu0
    %v1366 = vpop.f32.mrb[0].mxu0
    %v1367 = vadd.f32 0.0, %v1366
    %v1368 = vpop.f32.mrb[0].mxu0
    %1369 = vmatprep.mubr.bf16.mxu0 0
    %1370 = vmatmul.mubr.bf16.gmra.mrb[0].mxu0 %v1316
    %v1371 = vpop.f32.mrb[0].mxu0
    %v1372 = vadd.f32 0.0, %v1371
    %v1373 = vpop.f32.mrb[0].mxu0
    %v1374 = vpop.f32.mrb[0].mxu0
    %v1375 = vadd.f32 0.0, %v1374
    %v1376 = vpop.f32.mrb[0].mxu0
    %1377 = vmatprep.mubr.bf16.mxu0 0
    %1378 = vmatmul.mubr.bf16.gmra.mrb[0].mxu0 %v1319
    %v1379 = vpop.f32.mrb[0].mxu0
    %v1380 = vadd.f32 0.0, %v1379
    %v1381 = vpop.f32.mrb[0].mxu0
    %v1382 = vpop.f32.mrb[0].mxu0
    %v1383 = vadd.f32 0.0, %v1382
    %v1384 = vpop.f32.mrb[0].mxu0
    %1385 = vdwg.mxu0
    %1388 = vrot.lane.b32.xlu0 %v1364, 8
    %v1389 = vpop.permute.xlu0 %1388
    %1390 = vrot.lane.b32.xlu0 %v1367, 8
    %v1391 = vpop.permute.xlu0 %1390
    %1396 = vrot.lane.b32.xlu0 %v1372, 16
    %v1397 = vpop.permute.xlu0 %1396
    %1398 = vrot.lane.b32.xlu0 %v1375, 16
    %v1399 = vpop.permute.xlu0 %1398
    %1404 = vrot.lane.b32.xlu0 %v1380, 24
    %v1405 = vpop.permute.xlu0 %1404
    %1406 = vrot.lane.b32.xlu0 %v1383, 24
    %v1407 = vpop.permute.xlu0 %1406
    %v1410 = vsel %vm330, %v1356, %v1389
    %v1411 = vsel %vm330, %v1359, %v1391
    %v1412 = vsel %vm616, %v1410, %v1397
    %v1413 = vsel %vm616, %v1411, %v1399
    %v1414 = vsel %vm619, %v1412, %v1405
    %v1415 = vsel %vm619, %v1413, %v1407
    %s1416 = scalar_lea.vmem %s6, 16
    %v1417 = vld [vmem:[%s1416] sm:$0xf]
    %v1418 = vld [vmem:[%s1416 + $0x4] sm:$0xf]
    %v1419 = vld [vmem:[%s1416 + $0x8] sm:$0xf]
    %v1420 = vld [vmem:[%s1416 + $0xc] sm:$0xf]
    %v1421 = vpack.c.bf16 %v1415, %v1414
    %v1426 = vunpack.c.l.b16 %v1417
    %v1427 = vunpack.c.l.b16 %v1418
    %v1428 = vunpack.c.l.b16 %v1419
    %v1429 = vunpack.c.l.b16 %v1420
    %v1430 = vpack.c.b16 %v1427, %v1426
    %v1431 = vpack.c.b16 %v1429, %v1428
    %v1435 = vsel %vm59, %v1421, 0
    %1437 = vmatprep.subr.bf16.mxu0 0
    %1438 = vmatpush1.bf16.msra.mxu0 %v1430
    %1439 = vmatprep.subr.bf16.mxu0 0
    %1440 = vmatpush1.bf16.msra.mxu0 %v1431
    %1441 = vmatprep.subr.bf16.mxu0 0
    %1442 = vmatpush1.bf16.msra.mxu0 0
    %1443 = vmatprep.subr.bf16.mxu0 0
    %1444 = vmatpush1.bf16.msra.mxu0 0
    %1445 = vmatprep.subr.bf16.mxu0 0
    %1446 = vmatpush1.bf16.msra.mxu0 0
    %1447 = vmatprep.subr.bf16.mxu0 0
    %1448 = vmatpush1.bf16.msra.mxu0 0
    %1449 = vmatprep.subr.bf16.mxu0 0
    %1450 = vmatpush1.bf16.msra.mxu0 0
    %1451 = vmatprep.subr.bf16.mxu0 0
    %1452 = vmatpush1.bf16.msra.mxu0 0
    %1453 = vmatprep.subr.bf16.mxu0 0
    %1454 = vmatpush1.bf16.msra.mxu0 0
    %1455 = vmatprep.subr.bf16.mxu0 0
    %1456 = vmatpush1.bf16.msra.mxu0 0
    %1457 = vmatprep.subr.bf16.mxu0 0
    %1458 = vmatpush1.bf16.msra.mxu0 0
    %1459 = vmatprep.subr.bf16.mxu0 0
    %1460 = vmatpush1.bf16.msra.mxu0 0
    %1461 = vmatprep.subr.bf16.mxu0 0
    %1462 = vmatpush1.bf16.msra.mxu0 0
    %1463 = vmatprep.subr.bf16.mxu0 0
    %1464 = vmatpush1.bf16.msra.mxu0 0
    %1465 = vmatprep.subr.bf16.mxu0 0
    %1466 = vmatpush1.bf16.msra.mxu0 0
    %1467 = vmatprep.subr.bf16.mxu0 0
    %1468 = vmatpush1.bf16.msra.mxu0 0
    %1469 = vmatprep.mubr.bf16.mxu0 0
    %1470 = vmatmul.mubr.bf16.gmra.mrb[0].mxu0 %v1435
    %v1471 = vpop.f32.mrb[0].mxu0
    %v1472 = vadd.f32 0.0, %v1471
    %v1473 = vpop.f32.mrb[0].mxu0
    %v1474 = vpop.f32.mrb[0].mxu0
    %v1475 = vadd.f32 0.0, %v1474
    %v1476 = vpop.f32.mrb[0].mxu0
    %1477 = vdwg.mxu0
    %v1478 = vadd.f32 %v850, %v1472
    %v1479 = vadd.f32 %v851, %v1475
    %s1480 = scalar_lea.vmem %s7, 1
    %v1481 = vld [vmem:[%s1480] sm:$0x1]
    %v1482 = vmul.f32 %v1478, %v1478
    %v1483 = vmul.f32 %v1479, %v1479
    %v1484 = vsel %vm59, %v1482, 0.0
    %1485 = vadd.xlane.f32.xlu0 %v1484
    %v1486 = vpop.xlane.xlu0 %1485
    %v1487 = vsel %vm59, %v1483, 0.0
    %1488 = vadd.xlane.f32.xlu0 %v1487
    %v1489 = vpop.xlane.xlu0 %1488
    %v1490 = vmul.f32 %v1486, %v66
    %v1491 = vmul.f32 %v1489, %v66
    %v1492 = vadd.f32 %v1490, 1e-06
    %v1493 = vadd.f32 %v1491, 1e-06
    %v1494 = vrsqrt.pop %v1492
    %v1495 = vrsqrt.pop %v1493
    %v1496 = vmul.f32 %v1478, %v1494
    %v1497 = vmul.f32 %v1479, %v1495
    %v1499 = vlaneseq
    %v1500 = vshrl.u32 %v1499, 7
    %v1501 = vsub.s32 0, %v1500
    %v1502 = vrot.slane %v1481, %v1501
    %v1504 = vmul.f32 %v1496, %v1502
    %v1505 = vmul.f32 %v1497, %v1502
    %s1506 = scalar_lea.vmem %s8, 16
    %v1507 = vld [vmem:[%s1506] sm:$0xf]
    %v1508 = vld [vmem:[%s1506 + $0x4] sm:$0xf]
    %v1509 = vld [vmem:[%s1506 + $0x8] sm:$0xf]
    %v1510 = vld [vmem:[%s1506 + $0xc] sm:$0xf]
    %v1511 = vpack.c.bf16 %v1505, %v1504
    %v1516 = vunpack.c.l.b16 %v1507
    %v1517 = vunpack.c.l.b16 %v1508
    %v1518 = vunpack.c.l.b16 %v1509
    %v1519 = vunpack.c.l.b16 %v1510
    %v1520 = vpack.c.b16 %v1517, %v1516
    %v1521 = vpack.c.b16 %v1519, %v1518
    %v1525 = vsel %vm59, %v1511, 0
    %1527 = vmatprep.subr.bf16.mxu0 0
    %1528 = vmatpush1.bf16.msra.mxu0 %v1520
    %1529 = vmatprep.subr.bf16.mxu0 0
    %1530 = vmatpush1.bf16.msra.mxu0 %v1521
    %1531 = vmatprep.subr.bf16.mxu0 0
    %1532 = vmatpush1.bf16.msra.mxu0 0
    %1533 = vmatprep.subr.bf16.mxu0 0
    %1534 = vmatpush1.bf16.msra.mxu0 0
    %1535 = vmatprep.subr.bf16.mxu0 0
    %1536 = vmatpush1.bf16.msra.mxu0 0
    %1537 = vmatprep.subr.bf16.mxu0 0
    %1538 = vmatpush1.bf16.msra.mxu0 0
    %1539 = vmatprep.subr.bf16.mxu0 0
    %1540 = vmatpush1.bf16.msra.mxu0 0
    %1541 = vmatprep.subr.bf16.mxu0 0
    %1542 = vmatpush1.bf16.msra.mxu0 0
    %1543 = vmatprep.subr.bf16.mxu0 0
    %1544 = vmatpush1.bf16.msra.mxu0 0
    %1545 = vmatprep.subr.bf16.mxu0 0
    %1546 = vmatpush1.bf16.msra.mxu0 0
    %1547 = vmatprep.subr.bf16.mxu0 0
    %1548 = vmatpush1.bf16.msra.mxu0 0
    %1549 = vmatprep.subr.bf16.mxu0 0
    %1550 = vmatpush1.bf16.msra.mxu0 0
    %1551 = vmatprep.subr.bf16.mxu0 0
    %1552 = vmatpush1.bf16.msra.mxu0 0
    %1553 = vmatprep.subr.bf16.mxu0 0
    %1554 = vmatpush1.bf16.msra.mxu0 0
    %1555 = vmatprep.subr.bf16.mxu0 0
    %1556 = vmatpush1.bf16.msra.mxu0 0
    %1557 = vmatprep.subr.bf16.mxu0 0
    %1558 = vmatpush1.bf16.msra.mxu0 0
    %1559 = vmatprep.mubr.bf16.mxu0 0
    %1560 = vmatmul.mubr.bf16.gmra.mrb[0].mxu0 %v1525
    %v1561 = vpop.f32.mrb[0].mxu0
    %v1562 = vadd.f32 0.0, %v1561
    %v1563 = vpop.f32.mrb[0].mxu0
    %v1564 = vpop.f32.mrb[0].mxu0
    %v1565 = vadd.f32 0.0, %v1564
    %v1566 = vpop.f32.mrb[0].mxu0
    %1567 = vdwg.mxu0
    %v1568 = vmax.f32 %v1562, 0.0
    %v1569 = vmax.f32 %v1565, 0.0
    %s1570 = scalar_lea.vmem %s9, 32
    %v1571 = vld [vmem:[%s1570] sm:$0xf]
    %v1572 = vld [vmem:[%s1570 + $0x4] sm:$0xf]
    %v1573 = vld [vmem:[%s1570 + $0x8] sm:$0xf]
    %v1574 = vld [vmem:[%s1570 + $0xc] sm:$0xf]
    %v1575 = vld [vmem:[%s1570 + $0x10] sm:$0xf]
    %v1576 = vld [vmem:[%s1570 + $0x14] sm:$0xf]
    %v1577 = vld [vmem:[%s1570 + $0x18] sm:$0xf]
    %v1578 = vld [vmem:[%s1570 + $0x1c] sm:$0xf]
    %v1579 = vpack.c.bf16 %v1569, %v1568
    %v1588 = vunpack.c.l.b16 %v1571
    %v1589 = vunpack.c.l.b16 %v1572
    %v1590 = vunpack.c.l.b16 %v1573
    %v1591 = vunpack.c.l.b16 %v1574
    %v1592 = vunpack.c.l.b16 %v1575
    %v1593 = vunpack.c.l.b16 %v1576
    %v1594 = vunpack.c.l.b16 %v1577
    %v1595 = vunpack.c.l.b16 %v1578
    %v1596 = vpack.c.b16 %v1589, %v1588
    %v1597 = vpack.c.b16 %v1591, %v1590
    %v1598 = vpack.c.b16 %v1593, %v1592
    %v1599 = vpack.c.b16 %v1595, %v1594
    %v1605 = vsel %vm420, %v1579, 0
    %1607 = vmatprep.subr.bf16.mxu0 0
    %1608 = vmatpush1.bf16.msra.mxu0 %v1596
    %1609 = vmatprep.subr.bf16.mxu0 0
    %1610 = vmatpush1.bf16.msra.mxu0 %v1597
    %1611 = vmatprep.subr.bf16.mxu0 0
    %1612 = vmatpush1.bf16.msra.mxu0 %v1598
    %1613 = vmatprep.subr.bf16.mxu0 0
    %1614 = vmatpush1.bf16.msra.mxu0 %v1599
    %1615 = vmatprep.subr.bf16.mxu0 0
    %1616 = vmatpush1.bf16.msra.mxu0 0
    %1617 = vmatprep.subr.bf16.mxu0 0
    %1618 = vmatpush1.bf16.msra.mxu0 0
    %1619 = vmatprep.subr.bf16.mxu0 0
    %1620 = vmatpush1.bf16.msra.mxu0 0
    %1621 = vmatprep.subr.bf16.mxu0 0
    %1622 = vmatpush1.bf16.msra.mxu0 0
    %1623 = vmatprep.subr.bf16.mxu0 0
    %1624 = vmatpush1.bf16.msra.mxu0 0
    %1625 = vmatprep.subr.bf16.mxu0 0
    %1626 = vmatpush1.bf16.msra.mxu0 0
    %1627 = vmatprep.subr.bf16.mxu0 0
    %1628 = vmatpush1.bf16.msra.mxu0 0
    %1629 = vmatprep.subr.bf16.mxu0 0
    %1630 = vmatpush1.bf16.msra.mxu0 0
    %1631 = vmatprep.subr.bf16.mxu0 0
    %1632 = vmatpush1.bf16.msra.mxu0 0
    %1633 = vmatprep.subr.bf16.mxu0 0
    %1634 = vmatpush1.bf16.msra.mxu0 0
    %1635 = vmatprep.subr.bf16.mxu0 0
    %1636 = vmatpush1.bf16.msra.mxu0 0
    %1637 = vmatprep.subr.bf16.mxu0 0
    %1638 = vmatpush1.bf16.msra.mxu0 0
    %1639 = vmatprep.mubr.bf16.mxu0 0
    %1640 = vmatmul.mubr.bf16.gmra.mrb[0].mxu0 %v1605
    %v1641 = vpop.f32.mrb[0].mxu0
    %v1642 = vadd.f32 0.0, %v1641
    %v1643 = vpop.f32.mrb[0].mxu0
    %v1644 = vpop.f32.mrb[0].mxu0
    %v1645 = vadd.f32 0.0, %v1644
    %v1646 = vpop.f32.mrb[0].mxu0
    %1647 = vdwg.mxu0
    %v1648 = vadd.f32 %v1478, %v1642
    %v1649 = vadd.f32 %v1479, %v1645
    %v1651 = vrot.slane %v1649, 7
    %vm1653 = vcmask 1040384
    %v1654 = vsel %vm1653, %v1648, %v1651
    %v1655 = vld [vmem:[%s10] sm:$0x1]
    %v1656 = vmul.f32 %v1654, %v1654
    %vm1657 = vcmask 254976
    %v1658 = vsel %vm1657, %v1656, 0.0
    %1659 = vadd.xlane.f32.xlu0 %v1658
    %v1660 = vpop.xlane.xlu0 %1659
    %v1661 = vmul.f32 %v1660, %v66
    %v1662 = vadd.f32 %v1661, 1e-06
    %v1663 = vrsqrt.pop %v1662
    %v1664 = vmul.f32 %v1654, %v1663
    %v1666 = vlaneseq
    %v1667 = vshrl.u32 %v1666, 7
    %v1668 = vsub.s32 0, %v1667
    %v1669 = vrot.slane %v1655, %v1668
    %v1671 = vmul.f32 %v1664, %v1669
    %v1672 = vld [vmem:[%s11] sm:$0xf]
    %v1673 = vld [vmem:[%s11 + $0x4] sm:$0xf]
    %v1674 = vld [vmem:[%s11 + $0x8] sm:$0xf]
    %v1675 = vld [vmem:[%s11 + $0xc] sm:$0xf]
    %v1676 = vpack.c.bf16 %v1671, %v1671
    %v1677 = vld [vmem:[%s12] sm:$0x1]
    %v1679 = vlaneseq
    %v1680 = vshrl.u32 %v1679, 7
    %v1681 = vsub.s32 0, %v1680
    %v1682 = vrot.slane %v1677, %v1681
    %v1688 = vunpack.c.l.b16 %v1672
    %v1689 = vunpack.c.l.b16 %v1673
    %v1690 = vunpack.c.l.b16 %v1674
    %v1691 = vunpack.c.l.b16 %v1675
    %v1692 = vpack.c.b16 %v1689, %v1688
    %v1693 = vpack.c.b16 %v1691, %v1690
    %v1697 = vsel %vm59, %v1676, 0
    %1699 = vmatprep.subr.bf16.mxu0 0
    %1700 = vmatpush1.bf16.msra.mxu0 %v1692
    %1701 = vmatprep.subr.bf16.mxu0 0
    %1702 = vmatpush1.bf16.msra.mxu0 %v1693
    %1703 = vmatprep.subr.bf16.mxu0 0
    %1704 = vmatpush1.bf16.msra.mxu0 0
    %1705 = vmatprep.subr.bf16.mxu0 0
    %1706 = vmatpush1.bf16.msra.mxu0 0
    %1707 = vmatprep.subr.bf16.mxu0 0
    %1708 = vmatpush1.bf16.msra.mxu0 0
    %1709 = vmatprep.subr.bf16.mxu0 0
    %1710 = vmatpush1.bf16.msra.mxu0 0
    %1711 = vmatprep.subr.bf16.mxu0 0
    %1712 = vmatpush1.bf16.msra.mxu0 0
    %1713 = vmatprep.subr.bf16.mxu0 0
    %1714 = vmatpush1.bf16.msra.mxu0 0
    %1715 = vmatprep.subr.bf16.mxu0 0
    %1716 = vmatpush1.bf16.msra.mxu0 0
    %1717 = vmatprep.subr.bf16.mxu0 0
    %1718 = vmatpush1.bf16.msra.mxu0 0
    %1719 = vmatprep.subr.bf16.mxu0 0
    %1720 = vmatpush1.bf16.msra.mxu0 0
    %1721 = vmatprep.subr.bf16.mxu0 0
    %1722 = vmatpush1.bf16.msra.mxu0 0
    %1723 = vmatprep.subr.bf16.mxu0 0
    %1724 = vmatpush1.bf16.msra.mxu0 0
    %1725 = vmatprep.subr.bf16.mxu0 0
    %1726 = vmatpush1.bf16.msra.mxu0 0
    %1727 = vmatprep.subr.bf16.mxu0 0
    %1728 = vmatpush1.bf16.msra.mxu0 0
    %1729 = vmatprep.subr.bf16.mxu0 0
    %1730 = vmatpush1.bf16.msra.mxu0 0
    %1731 = vmatprep.mubr.bf16.mxu0 0
    %1732 = vmatmul.mubr.bf16.gmra.mrb[0].mxu0 %v1697
    %v1733 = vpop.f32.mrb[0].mxu0
    %v1734 = vadd.f32 %v1682, %v1733
    %v1735 = vpop.f32.mrb[0].mxu0
    %v1736 = vpop.f32.mrb[0].mxu0
    %v1737 = vpop.f32.mrb[0].mxu0
    %1738 = vdwg.mxu0
    %1739 = vst [vmem:[#allocation2] sm:$0x3] %v1734
    // Predicated region
    $region54: #{t5_classifier_forward.1} parent=1 // pred_check
      _
    $region55: #{t5_classifier_forward.1} parent=1 // pred_check_branch
      %1741 = sbr.rel (0) target = $region57
    $region56: #{t5_classifier_forward.1} parent=1 // pred_region
      %s1743 = ssub.s32 32, 32
      %1744 = vsyncadd [#allocation3], %s1743
      %s1746 = sshll.u32 [#allocation2], 4
      %s1747 = int_to_ptr.vmem [resolvable:$true] %s1746
      %1749 = dma.vmem_to_hbm [thread:$0]  %s1747, 32, %s13, [#allocation3]
    $region57: #{t5_classifier_forward.1} parent=1 // pred_fallthru
      _
    // Predicated region
    $region58: #{t5_classifier_forward.1} parent=1 // pred_check
      _
    $region59: #{t5_classifier_forward.1} parent=1 // pred_check_branch
      %1751 = sbr.rel (0) target = $region61
    $region60: #{t5_classifier_forward.1} parent=1 // pred_region
      %1752 = dma.done [#allocation3], 32
    $region61: #{t5_classifier_forward.1} parent=1 // pred_fallthru
      _
    %1753 = vsyncpa [#allocation3], 1

</llo_original>
